<compile_context>
chip_gen: v7x
topology: tpu7x:2x2x1
jax: 0.10.0
libtpu: 0.0.40
codegen_flags: <defaults>
</compile_context>

<pallas_src>
import math
import functools

import numpy as np
import jax
import jax.numpy as jnp
from jax import lax
from jax.experimental import pallas as pl
from jax.experimental.pallas import tpu as pltpu


_LANE = 128
_SUBLANE = 8
_NEG_FILL = -float(1 << 32)   # torch.masked_fill(..., -(1 << 32)) value, exact in f32
_EPS = 1e-12


def _round_up(x, m):
    return (x + m - 1) // m * m


def _pad2d(x, rows, cols, dtype=jnp.float32):
    x = jnp.asarray(x, jnp.float32)
    x = jnp.pad(x, ((0, rows - x.shape[0]), (0, cols - x.shape[1])))
    return x.astype(dtype)


# ----------------------------------------------------------------------------
# Fused kernel: aggregator + desc MLPs + projection heads + norm + scaled logits
# ----------------------------------------------------------------------------
def _chem_align_kernel(scale_ref,                      # SMEM (1,1) logit scale
                       mole_ref, sub_ref, mask_ref, desc_ref,
                       wq_ref, bq_ref, wk_ref, bk_ref,
                       gw_ref, gb_ref,
                       b1_ref, b2_ref, b3_ref, b4_ref,
                       w1_hbm, w2_hbm, w3_hbm, w4_hbm,   # pl.ANY (HBM) bf16
                       out_ref,
                       w1_v, w2_v, w3_v, w4_v, dma_sem,  # VMEM scratch + sems
                       *, mid_dim):
    f32 = jnp.float32
    bf16 = jnp.bfloat16

    # Start the desc-tower weight DMAs immediately so the ~1 MiB fetch overlaps
    # with the attention / graph_linear compute below (manual P4 overlap).
    cps = [
        pltpu.make_async_copy(w1_hbm, w1_v, dma_sem.at[0]),
        pltpu.make_async_copy(w2_hbm, w2_v, dma_sem.at[1]),
        pltpu.make_async_copy(w3_hbm, w3_v, dma_sem.at[2]),
        pltpu.make_async_copy(w4_hbm, w4_v, dma_sem.at[3]),
    ]
    for cp in cps:
        cp.start()

    # ---- AdjAttenAgger (all-f32 path, exact softmax) -------------------------
    main = mole_ref[...]
    other = sub_ref[...]
    q = jnp.dot(main, wq_ref[...], preferred_element_type=f32) + bq_ref[...]
    k = jnp.dot(other, wk_ref[...], preferred_element_type=f32) + bk_ref[...]
    # Q @ K^T via dot_general contracting last axes -> no explicit transpose.
    attn = lax.dot_general(q, k, (((1,), (1,)), ((), ())),
                           preferred_element_type=f32)
    # additive mask (0 where proj>0, -2^32 elsewhere incl. padded sub columns)
    attn = attn * f32(1.0 / math.sqrt(mid_dim)) + mask_ref[...]
    attn = attn - jnp.max(attn, axis=-1, keepdims=True)
    e = jnp.exp(attn)
    p = e / jnp.sum(e, axis=-1, keepdims=True)   # exact divide (tiny tile)
    agg = jnp.dot(p, other, preferred_element_type=f32)

    # ---- graph_linear + L2 norm; logit_scale folded into the normalisation ---
    m = jnp.dot(agg, gw_ref[...], preferred_element_type=f32) + gb_ref[...]
    m = m * (scale_ref[0, 0] *
             lax.rsqrt(jnp.sum(m * m, axis=-1, keepdims=True) + f32(_EPS)))

    # ---- desc_encoder + desc_linear (bf16 matmul operands, f32 accumulation) -
    cps[0].wait()
    h = jnp.maximum(
        jnp.dot(desc_ref[...].astype(bf16), w1_v[...],
                preferred_element_type=f32) + b1_ref[...], 0.0)
    cps[1].wait()
    h = jnp.dot(h.astype(bf16), w2_v[...], preferred_element_type=f32) + b2_ref[...]
    cps[2].wait()
    h = jnp.maximum(
        jnp.dot(h.astype(bf16), w3_v[...], preferred_element_type=f32) + b3_ref[...],
        0.0)
    cps[3].wait()
    d = jnp.dot(h.astype(bf16), w4_v[...], preferred_element_type=f32) + b4_ref[...]
    d = d * lax.rsqrt(jnp.sum(d * d, axis=-1, keepdims=True) + f32(_EPS))

    # ---- logits = (logit_scale * m_hat) @ d_hat^T ----------------------------
    out_ref[...] = lax.dot_general(m, d, (((1,), (1,)), ((), ())),
                                   preferred_element_type=f32)


# ----------------------------------------------------------------------------
# Host-side: one-time zero-padding of the weights to MXU / vreg friendly shapes
# (numerically identical: padded rows/cols are zero).  Desc-tower weights bf16.
# ----------------------------------------------------------------------------
def pad_chem_align_params(params):
    emb = params["agg_wq"].shape[0]
    emb_p = _round_up(emb, _LANE)                           # 32  -> 128
    desc_in_p = _round_up(params["d_w1"].shape[0], _LANE)   # 77  -> 128
    out_p = _round_up(params["g_w"].shape[1], _LANE)        # 64  -> 128
    h1 = params["d_w1"].shape[1]                            # 512
    h2 = params["d_w3"].shape[1]                            # 256

    pp = {"mid_dim": int(emb)}
    # attention / graph head stay f32 (small, keeps the m-path full precision)
    pp["agg_wq"] = _pad2d(params["agg_wq"], emb_p, emb_p)
    pp["agg_bq"] = _pad2d(params["agg_bq"], 1, emb_p)
    pp["agg_wk"] = _pad2d(params["agg_wk"], emb_p, emb_p)
    pp["agg_bk"] = _pad2d(params["agg_bk"], 1, emb_p)
    pp["g_w"] = _pad2d(params["g_w"], emb_p, out_p)
    pp["g_b"] = _pad2d(params["g_b"], 1, out_p)
    # desc tower weights in bf16 (dominant HBM traffic), biases in f32
    pp["d_w1"] = _pad2d(params["d_w1"], desc_in_p, h1, jnp.bfloat16)
    pp["d_b1"] = _pad2d(params["d_b1"], 1, h1)
    pp["d_w2"] = _pad2d(params["d_w2"], h1, h1, jnp.bfloat16)
    pp["d_b2"] = _pad2d(params["d_b2"], 1, h1)
    pp["d_w3"] = _pad2d(params["d_w3"], h1, h2, jnp.bfloat16)
    pp["d_b3"] = _pad2d(params["d_b3"], 1, h2)
    pp["d_w4"] = _pad2d(params["d_w4"], h2, out_p, jnp.bfloat16)
    pp["d_b4"] = _pad2d(params["d_b4"], 1, out_p)
    return pp


# ----------------------------------------------------------------------------
# Forward wrapper: pads activations, launches the single fused kernel, slices.
# ----------------------------------------------------------------------------
def chem_align_forward(mole_features, sub_features, sub_projection, desc,
                       padded_params, logit_scale):
    pp = padded_params
    mid_dim = pp["mid_dim"]

    n_mol = mole_features.shape[0]
    n_sub = sub_features.shape[0]
    n_desc = desc.shape[0]

    emb_p = pp["agg_wq"].shape[0]
    desc_in_p = pp["d_w1"].shape[0]
    h1 = pp["d_w1"].shape[1]
    h2 = pp["d_w3"].shape[1]
    out_p = pp["g_w"].shape[1]

    n_mol_p = _round_up(max(n_mol, 1), _SUBLANE)
    n_sub_p = _round_up(max(n_sub, 1), _SUBLANE)
    n_desc_p = _round_up(max(n_desc, 1), _SUBLANE)   # 8, not 128: no wasted MLP work

    # zero padding: padded sub columns are killed by the additive mask; padded
    # mole / desc rows only produce rows/cols that are sliced away below.
    mole_p = _pad2d(mole_features, n_mol_p, emb_p)
    sub_p = _pad2d(sub_features, n_sub_p, emb_p)
    desc_p = _pad2d(desc, n_desc_p, desc_in_p)

    # additive mask: 0 where proj>0, -2^32 elsewhere (padded columns included)
    mask_core = jnp.where(jnp.asarray(sub_projection, jnp.float32) > 0.0,
                          jnp.float32(0.0), jnp.float32(_NEG_FILL))
    mask_p = jnp.full((n_mol_p, n_sub_p), _NEG_FILL, jnp.float32)
    mask_p = mask_p.at[:n_mol, :n_sub].set(mask_core)

    scale = jnp.asarray(logit_scale, jnp.float32).reshape(1, 1)

    def vmem():
        return pl.BlockSpec(memory_space=pltpu.MemorySpace.VMEM)

    smem = pl.BlockSpec(memory_space=pltpu.MemorySpace.SMEM)
    hbm = lambda: pl.BlockSpec(memory_space=pl.ANY)

    operands = (scale, mole_p, sub_p, mask_p, desc_p,
                pp["agg_wq"], pp["agg_bq"], pp["agg_wk"], pp["agg_bk"],
                pp["g_w"], pp["g_b"],
                pp["d_b1"], pp["d_b2"], pp["d_b3"], pp["d_b4"],
                pp["d_w1"], pp["d_w2"], pp["d_w3"], pp["d_w4"])

    # advisory cost estimate so XLA can overlap this small call with neighbours
    flops = 2 * (n_mol_p * emb_p * emb_p
                 + n_sub_p * emb_p * emb_p
                 + 2 * n_mol_p * n_sub_p * emb_p
                 + n_mol_p * emb_p * out_p
                 + n_desc_p * (desc_in_p * h1 + h1 * h1 + h1 * h2 + h2 * out_p)
                 + n_mol_p * n_desc_p * out_p)
    transcendentals = n_mol_p * n_sub_p + n_mol_p + n_desc_p
    bytes_accessed = (sum(int(a.size) * a.dtype.itemsize for a in operands)
                      + n_mol_p * n_desc_p * 4)

    out = pl.pallas_call(
        functools.partial(_chem_align_kernel, mid_dim=mid_dim),
        out_shape=jax.ShapeDtypeStruct((n_mol_p, n_desc_p), jnp.float32),
        in_specs=[smem] + [vmem() for _ in range(14)] + [hbm() for _ in range(4)],
        out_specs=vmem(),
        scratch_shapes=[
            pltpu.VMEM(pp["d_w1"].shape, jnp.bfloat16),
            pltpu.VMEM(pp["d_w2"].shape, jnp.bfloat16),
            pltpu.VMEM(pp["d_w3"].shape, jnp.bfloat16),
            pltpu.VMEM(pp["d_w4"].shape, jnp.bfloat16),
            pltpu.SemaphoreType.DMA((4,)),
        ],
        cost_estimate=pl.CostEstimate(flops=int(flops),
                                      transcendentals=int(transcendentals),
                                      bytes_accessed=int(bytes_accessed)),
    )(*operands)

    return out[:n_mol, :n_desc]


# ----------------------------------------------------------------------------
# Pure-JAX references (sanity checks only)
# ----------------------------------------------------------------------------
def _reference_f32(mole, sub, proj, desc, params, logit_scale):
    emb_dim = mole.shape[1]
    q = mole @ params["agg_wq"] + params["agg_bq"]
    k = sub @ params["agg_wk"] + params["agg_bk"]
    attn = (q @ k.T) / math.sqrt(emb_dim)
    attn = jnp.where(proj <= 0, jnp.float32(_NEG_FILL), attn)
    attn = jax.nn.softmax(attn, axis=-1)
    o = attn @ sub
    h = jax.nn.relu(desc @ params["d_w1"] + params["d_b1"])
    h = h @ params["d_w2"] + params["d_b2"]
    h = jax.nn.relu(h @ params["d_w3"] + params["d_b3"])
    d = h @ params["d_w4"] + params["d_b4"]
    m = o @ params["g_w"] + params["g_b"]
    m = m / jnp.linalg.norm(m, axis=1, keepdims=True)
    d = d / jnp.linalg.norm(d, axis=1, keepdims=True)
    return logit_scale * m @ d.T


def _reference_matched(mole, sub, proj, desc, params, logit_scale):
    """Same numerics as the kernel: f32 attention path, bf16-operand matmuls
    (f32 accumulation) in the desc tower, eps'd L2 norms."""
    f32, bf16 = jnp.float32, jnp.bfloat16
    emb_dim = mole.shape[1]
    q = mole @ params["agg_wq"] + params["agg_bq"]
    k = sub @ params["agg_wk"] + params["agg_bk"]
    attn = (q @ k.T) / math.sqrt(emb_dim)
    attn = jnp.where(proj <= 0, jnp.float32(_NEG_FILL), attn)
    attn = jax.nn.softmax(attn, axis=-1)
    o = attn @ sub
    m = o @ params["g_w"] + params["g_b"]
    m = m / jnp.sqrt(jnp.sum(m * m, axis=-1, keepdims=True) + _EPS)

    bdot = lambda x, w: jnp.dot(x.astype(bf16), w.astype(bf16),
                                preferred_element_type=f32)
    h = jax.nn.relu(bdot(desc, params["d_w1"]) + params["d_b1"])
    h = bdot(h, params["d_w2"]) + params["d_b2"]
    h = jax.nn.relu(bdot(h, params["d_w3"]) + params["d_b3"])
    d = bdot(h, params["d_w4"]) + params["d_b4"]
    d = d / jnp.sqrt(jnp.sum(d * d, axis=-1, keepdims=True) + _EPS)
    return logit_scale * m @ d.T


def _init_linear(key, fan_in, fan_out):
    kw, kb = jax.random.split(key)
    bound = 1.0 / math.sqrt(fan_in)
    w = jax.random.uniform(kw, (fan_in, fan_out), jnp.float32, -bound, bound)
    b = jax.random.uniform(kb, (1, fan_out), jnp.float32, -bound, bound)
    return w, b


if __name__ == "__main__":
    key = jax.random.PRNGKey(0)
    emb_dim = 32          # GNN embedding size
    n_mol = 8             # molecules in the batch (== #descriptions)
    n_sub = 6             # substructures
    desc_dim = 77         # fixed by the module (nn.Linear(77, 512))

    keys = jax.random.split(key, 16)
    params = {}
    params["agg_wq"], params["agg_bq"] = _init_linear(keys[0], emb_dim, emb_dim)
    params["agg_wk"], params["agg_bk"] = _init_linear(keys[1], emb_dim, emb_dim)
    params["d_w1"], params["d_b1"] = _init_linear(keys[2], desc_dim, 512)
    params["d_w2"], params["d_b2"] = _init_linear(keys[3], 512, 512)
    params["d_w3"], params["d_b3"] = _init_linear(keys[4], 512, 256)
    params["d_w4"], params["d_b4"] = _init_linear(keys[5], 256, 64)
    params["g_w"], params["g_b"] = _init_linear(keys[6], emb_dim, 64)

    # stand-ins for the graph-encoder / SAB outputs
    mole_features = jax.random.normal(keys[7], (n_mol, emb_dim), jnp.float32)
    sub_features = jax.random.normal(keys[8], (n_sub, emb_dim), jnp.float32)
    # substructure projection matrix (>0 where substructure belongs to molecule);
    # guarantee at least one positive entry per row.
    proj = (jax.random.uniform(keys[9], (n_mol, n_sub)) > 0.5).astype(jnp.float32)
    proj = proj.at[:, 0].set(1.0)
    desc = jax.random.normal(keys[10], (n_mol, desc_dim), jnp.float32)
    logit_scale = float(np.exp(np.log(1.0 / 0.07)))   # CLIP default init

    padded_params = pad_chem_align_params(params)

    logits = chem_align_forward(mole_features, sub_features, proj, desc,
                                padded_params, logit_scale)
    jax.block_until_ready(logits)
    logits_np = np.asarray(logits)

    with jax.default_matmul_precision("highest"):
        ref_matched = _reference_matched(mole_features, sub_features, proj, desc,
                                         params, logit_scale)
        ref_f32 = _reference_f32(mole_features, sub_features, proj, desc,
                                 params, logit_scale)

    # tight check against a reference that mirrors the kernel's numerics
    np.testing.assert_allclose(logits_np, np.asarray(ref_matched),
                               rtol=2e-2, atol=1e-1)
    # looser check against the full-f32 PyTorch-equivalent reference; slack
    # accounts for the intentional bf16 quantisation of the desc tower
    # (logits are scaled by logit_scale ~ 14.3).
    np.testing.assert_allclose(logits_np, np.asarray(ref_f32),
                               rtol=5e-2, atol=4e-1)
    print("KERNEL_OK")
</pallas_src>

<mosaic_0001>
module attributes {stable_mosaic.version = 11 : i64} {
  func.func @_chem_align_kernel(%arg0: memref<1x1xf32, #tpu.memory_space<smem>>, %arg1: memref<8x128xf32, #tpu.memory_space<vmem>>, %arg2: memref<8x128xf32, #tpu.memory_space<vmem>>, %arg3: memref<8x8xf32, #tpu.memory_space<vmem>>, %arg4: memref<8x128xf32, #tpu.memory_space<vmem>>, %arg5: memref<128x128xf32, #tpu.memory_space<vmem>>, %arg6: memref<1x128xf32, #tpu.memory_space<vmem>>, %arg7: memref<128x128xf32, #tpu.memory_space<vmem>>, %arg8: memref<1x128xf32, #tpu.memory_space<vmem>>, %arg9: memref<128x128xf32, #tpu.memory_space<vmem>>, %arg10: memref<1x128xf32, #tpu.memory_space<vmem>>, %arg11: memref<1x512xf32, #tpu.memory_space<vmem>>, %arg12: memref<1x512xf32, #tpu.memory_space<vmem>>, %arg13: memref<1x256xf32, #tpu.memory_space<vmem>>, %arg14: memref<1x128xf32, #tpu.memory_space<vmem>>, %arg15: memref<128x512xbf16, #tpu.memory_space<any>>, %arg16: memref<512x512xbf16, #tpu.memory_space<any>>, %arg17: memref<512x256xbf16, #tpu.memory_space<any>>, %arg18: memref<256x128xbf16, #tpu.memory_space<any>>, %arg19: memref<8x8xf32, #tpu.memory_space<vmem>>, %arg20: memref<128x512xbf16, #tpu.memory_space<vmem>>, %arg21: memref<512x512xbf16, #tpu.memory_space<vmem>>, %arg22: memref<512x256xbf16, #tpu.memory_space<vmem>>, %arg23: memref<256x128xbf16, #tpu.memory_space<vmem>>, %arg24: memref<4x!tpu.dma_semaphore, #tpu.memory_space<semaphore_mem>>) attributes {dimension_semantics = [], scalar_prefetch = 0 : i64, scratch_operands = 5 : i64, tpu.core_type = #tpu.core_type<tc>} {
    %c0_i32 = arith.constant 0 : i32
    %0 = tpu.memref_slice %arg24[%c0_i32] : memref<4x!tpu.dma_semaphore, #tpu.memory_space<semaphore_mem>> -> memref<1x!tpu.dma_semaphore, #tpu.memory_space<semaphore_mem>>
    %1 = tpu.memref_squeeze %0 : memref<1x!tpu.dma_semaphore, #tpu.memory_space<semaphore_mem>> -> memref<!tpu.dma_semaphore, #tpu.memory_space<semaphore_mem>>
    tpu.enqueue_dma source(%arg15 : memref<128x512xbf16, #tpu.memory_space<any>>) target(%arg20 : memref<128x512xbf16, #tpu.memory_space<vmem>>) target_semaphore(%1 : memref<!tpu.dma_semaphore, #tpu.memory_space<semaphore_mem>>)
    %c1_i32 = arith.constant 1 : i32
    %2 = tpu.memref_slice %arg24[%c1_i32] : memref<4x!tpu.dma_semaphore, #tpu.memory_space<semaphore_mem>> -> memref<1x!tpu.dma_semaphore, #tpu.memory_space<semaphore_mem>>
    %3 = tpu.memref_squeeze %2 : memref<1x!tpu.dma_semaphore, #tpu.memory_space<semaphore_mem>> -> memref<!tpu.dma_semaphore, #tpu.memory_space<semaphore_mem>>
    tpu.enqueue_dma source(%arg16 : memref<512x512xbf16, #tpu.memory_space<any>>) target(%arg21 : memref<512x512xbf16, #tpu.memory_space<vmem>>) target_semaphore(%3 : memref<!tpu.dma_semaphore, #tpu.memory_space<semaphore_mem>>)
    %c2_i32 = arith.constant 2 : i32
    %4 = tpu.memref_slice %arg24[%c2_i32] : memref<4x!tpu.dma_semaphore, #tpu.memory_space<semaphore_mem>> -> memref<1x!tpu.dma_semaphore, #tpu.memory_space<semaphore_mem>>
    %5 = tpu.memref_squeeze %4 : memref<1x!tpu.dma_semaphore, #tpu.memory_space<semaphore_mem>> -> memref<!tpu.dma_semaphore, #tpu.memory_space<semaphore_mem>>
    tpu.enqueue_dma source(%arg17 : memref<512x256xbf16, #tpu.memory_space<any>>) target(%arg22 : memref<512x256xbf16, #tpu.memory_space<vmem>>) target_semaphore(%5 : memref<!tpu.dma_semaphore, #tpu.memory_space<semaphore_mem>>)
    %c3_i32 = arith.constant 3 : i32
    %6 = tpu.memref_slice %arg24[%c3_i32] : memref<4x!tpu.dma_semaphore, #tpu.memory_space<semaphore_mem>> -> memref<1x!tpu.dma_semaphore, #tpu.memory_space<semaphore_mem>>
    %7 = tpu.memref_squeeze %6 : memref<1x!tpu.dma_semaphore, #tpu.memory_space<semaphore_mem>> -> memref<!tpu.dma_semaphore, #tpu.memory_space<semaphore_mem>>
    tpu.enqueue_dma source(%arg18 : memref<256x128xbf16, #tpu.memory_space<any>>) target(%arg23 : memref<256x128xbf16, #tpu.memory_space<vmem>>) target_semaphore(%7 : memref<!tpu.dma_semaphore, #tpu.memory_space<semaphore_mem>>)
    %c0 = arith.constant 0 : index
    %c0_0 = arith.constant 0 : index
    %8 = vector.load %arg1[%c0, %c0_0] : memref<8x128xf32, #tpu.memory_space<vmem>>, vector<8x128xf32>
    %c0_1 = arith.constant 0 : index
    %c0_2 = arith.constant 0 : index
    %9 = vector.load %arg2[%c0_1, %c0_2] : memref<8x128xf32, #tpu.memory_space<vmem>>, vector<8x128xf32>
    %c0_3 = arith.constant 0 : index
    %c0_4 = arith.constant 0 : index
    %10 = vector.load %arg5[%c0_3, %c0_4] : memref<128x128xf32, #tpu.memory_space<vmem>>, vector<128x128xf32>
    %cst = arith.constant dense<0.000000e+00> : vector<8x128xf32>
    %11 = tpu.matmul %8, %10, %cst {dimension_numbers = #tpu.dot_dimension_numbers<[1], [0], [0], [1], [0, 0, 1, 1], [], []>} : vector<8x128xf32>, vector<128x128xf32>, vector<8x128xf32> -> vector<8x128xf32>
    %c0_5 = arith.constant 0 : index
    %c0_6 = arith.constant 0 : index
    %12 = vector.load %arg6[%c0_5, %c0_6] : memref<1x128xf32, #tpu.memory_space<vmem>>, vector<1x128xf32>
    %13 = vector.broadcast %12 : vector<1x128xf32> to vector<8x128xf32>
    %14 = arith.addf %11, %13 : vector<8x128xf32>
    %c0_7 = arith.constant 0 : index
    %c0_8 = arith.constant 0 : index
    %15 = vector.load %arg7[%c0_7, %c0_8] : memref<128x128xf32, #tpu.memory_space<vmem>>, vector<128x128xf32>
    %cst_9 = arith.constant dense<0.000000e+00> : vector<8x128xf32>
    %16 = tpu.matmul %9, %15, %cst_9 {dimension_numbers = #tpu.dot_dimension_numbers<[1], [0], [0], [1], [0, 0, 1, 1], [], []>} : vector<8x128xf32>, vector<128x128xf32>, vector<8x128xf32> -> vector<8x128xf32>
    %c0_10 = arith.constant 0 : index
    %c0_11 = arith.constant 0 : index
    %17 = vector.load %arg8[%c0_10, %c0_11] : memref<1x128xf32, #tpu.memory_space<vmem>>, vector<1x128xf32>
    %18 = vector.broadcast %17 : vector<1x128xf32> to vector<8x128xf32>
    %19 = arith.addf %16, %18 : vector<8x128xf32>
    %cst_12 = arith.constant dense<0.000000e+00> : vector<8x8xf32>
    %20 = tpu.matmul %14, %19, %cst_12 {dimension_numbers = #tpu.dot_dimension_numbers<[1], [1], [0], [0], [0, 0, 1, 0], [], []>} : vector<8x128xf32>, vector<8x128xf32>, vector<8x8xf32> -> vector<8x8xf32>
    %cst_13 = arith.constant 0.176776692 : f32
    %21 = vector.broadcast %cst_13 : f32 to vector<8x8xf32>
    %22 = arith.mulf %20, %21 : vector<8x8xf32>
    %c0_14 = arith.constant 0 : index
    %c0_15 = arith.constant 0 : index
    %23 = vector.load %arg3[%c0_14, %c0_15] : memref<8x8xf32, #tpu.memory_space<vmem>>, vector<8x8xf32>
    %24 = arith.addf %22, %23 : vector<8x8xf32>
    %cst_16 = arith.constant dense<0xFF800000> : vector<8xf32>
    %25 = vector.multi_reduction <maximumf>, %24, %cst_16 [1] : vector<8x8xf32> to vector<8xf32>
    %26 = vector.shape_cast %25 : vector<8xf32> to vector<8x1xf32>
    %27 = vector.broadcast %26 : vector<8x1xf32> to vector<8x8xf32>
    %28 = arith.subf %24, %27 : vector<8x8xf32>
    %29 = math.exp %28 : vector<8x8xf32>
    %cst_17 = arith.constant dense<0.000000e+00> : vector<8xf32>
    %30 = vector.multi_reduction <add>, %29, %cst_17 [1] : vector<8x8xf32> to vector<8xf32>
    %31 = vector.shape_cast %30 : vector<8xf32> to vector<8x1xf32>
    %32 = vector.broadcast %31 : vector<8x1xf32> to vector<8x8xf32>
    %33 = arith.divf %29, %32 : vector<8x8xf32>
    %cst_18 = arith.constant dense<0.000000e+00> : vector<8x128xf32>
    %34 = tpu.matmul %33, %9, %cst_18 {dimension_numbers = #tpu.dot_dimension_numbers<[1], [0], [0], [1], [0, 0, 1, 1], [], []>} : vector<8x8xf32>, vector<8x128xf32>, vector<8x128xf32> -> vector<8x128xf32>
    %c0_19 = arith.constant 0 : index
    %c0_20 = arith.constant 0 : index
    %35 = vector.load %arg9[%c0_19, %c0_20] : memref<128x128xf32, #tpu.memory_space<vmem>>, vector<128x128xf32>
    %cst_21 = arith.constant dense<0.000000e+00> : vector<8x128xf32>
    %36 = tpu.matmul %34, %35, %cst_21 {dimension_numbers = #tpu.dot_dimension_numbers<[1], [0], [0], [1], [0, 0, 1, 1], [], []>} : vector<8x128xf32>, vector<128x128xf32>, vector<8x128xf32> -> vector<8x128xf32>
    %c0_22 = arith.constant 0 : index
    %c0_23 = arith.constant 0 : index
    %37 = vector.load %arg10[%c0_22, %c0_23] : memref<1x128xf32, #tpu.memory_space<vmem>>, vector<1x128xf32>
    %38 = vector.broadcast %37 : vector<1x128xf32> to vector<8x128xf32>
    %39 = arith.addf %36, %38 : vector<8x128xf32>
    %c0_24 = arith.constant 0 : index
    %c0_25 = arith.constant 0 : index
    %40 = memref.load %arg0[%c0_24, %c0_25] : memref<1x1xf32, #tpu.memory_space<smem>>
    %41 = arith.mulf %39, %39 : vector<8x128xf32>
    %cst_26 = arith.constant dense<0.000000e+00> : vector<8xf32>
    %42 = vector.multi_reduction <add>, %41, %cst_26 [1] : vector<8x128xf32> to vector<8xf32>
    %43 = vector.shape_cast %42 : vector<8xf32> to vector<8x1xf32>
    %cst_27 = arith.constant 9.99999996E-13 : f32
    %44 = vector.broadcast %cst_27 : f32 to vector<8x1xf32>
    %45 = arith.addf %43, %44 : vector<8x1xf32>
    %46 = math.rsqrt %45 : vector<8x1xf32>
    %47 = vector.broadcast %40 : f32 to vector<8x1xf32>
    %48 = arith.mulf %47, %46 : vector<8x1xf32>
    %49 = vector.broadcast %48 : vector<8x1xf32> to vector<8x128xf32>
    %50 = arith.mulf %39, %49 : vector<8x128xf32>
    %c0_i32_28 = arith.constant 0 : i32
    %51 = tpu.memref_slice %arg24[%c0_i32_28] : memref<4x!tpu.dma_semaphore, #tpu.memory_space<semaphore_mem>> -> memref<1x!tpu.dma_semaphore, #tpu.memory_space<semaphore_mem>>
    %52 = tpu.memref_squeeze %51 : memref<1x!tpu.dma_semaphore, #tpu.memory_space<semaphore_mem>> -> memref<!tpu.dma_semaphore, #tpu.memory_space<semaphore_mem>>
    tpu.wait_dma2 semaphore(%52 : memref<!tpu.dma_semaphore, #tpu.memory_space<semaphore_mem>>) src(%arg15 : memref<128x512xbf16, #tpu.memory_space<any>>) dst(%arg20 : memref<128x512xbf16, #tpu.memory_space<vmem>>)
    %c0_29 = arith.constant 0 : index
    %c0_30 = arith.constant 0 : index
    %53 = vector.load %arg4[%c0_29, %c0_30] : memref<8x128xf32, #tpu.memory_space<vmem>>, vector<8x128xf32>
    %54 = arith.truncf %53 : vector<8x128xf32> to vector<8x128xbf16>
    %c0_31 = arith.constant 0 : index
    %c0_32 = arith.constant 0 : index
    %55 = vector.load %arg20[%c0_31, %c0_32] : memref<128x512xbf16, #tpu.memory_space<vmem>>, vector<128x512xbf16>
    %cst_33 = arith.constant dense<0.000000e+00> : vector<8x512xf32>
    %56 = tpu.matmul %54, %55, %cst_33 {dimension_numbers = #tpu.dot_dimension_numbers<[1], [0], [0], [1], [0, 0, 1, 1], [], []>} : vector<8x128xbf16>, vector<128x512xbf16>, vector<8x512xf32> -> vector<8x512xf32>
    %c0_34 = arith.constant 0 : index
    %c0_35 = arith.constant 0 : index
    %57 = vector.load %arg11[%c0_34, %c0_35] : memref<1x512xf32, #tpu.memory_space<vmem>>, vector<1x512xf32>
    %58 = vector.broadcast %57 : vector<1x512xf32> to vector<8x512xf32>
    %59 = arith.addf %56, %58 : vector<8x512xf32>
    %cst_36 = arith.constant 0.000000e+00 : f32
    %60 = vector.broadcast %cst_36 : f32 to vector<8x512xf32>
    %61 = arith.maximumf %59, %60 : vector<8x512xf32>
    %c1_i32_37 = arith.constant 1 : i32
    %62 = tpu.memref_slice %arg24[%c1_i32_37] : memref<4x!tpu.dma_semaphore, #tpu.memory_space<semaphore_mem>> -> memref<1x!tpu.dma_semaphore, #tpu.memory_space<semaphore_mem>>
    %63 = tpu.memref_squeeze %62 : memref<1x!tpu.dma_semaphore, #tpu.memory_space<semaphore_mem>> -> memref<!tpu.dma_semaphore, #tpu.memory_space<semaphore_mem>>
    tpu.wait_dma2 semaphore(%63 : memref<!tpu.dma_semaphore, #tpu.memory_space<semaphore_mem>>) src(%arg16 : memref<512x512xbf16, #tpu.memory_space<any>>) dst(%arg21 : memref<512x512xbf16, #tpu.memory_space<vmem>>)
    %64 = arith.truncf %61 : vector<8x512xf32> to vector<8x512xbf16>
    %c0_38 = arith.constant 0 : index
    %c0_39 = arith.constant 0 : index
    %65 = vector.load %arg21[%c0_38, %c0_39] : memref<512x512xbf16, #tpu.memory_space<vmem>>, vector<512x512xbf16>
    %cst_40 = arith.constant dense<0.000000e+00> : vector<8x512xf32>
    %66 = tpu.matmul %64, %65, %cst_40 {dimension_numbers = #tpu.dot_dimension_numbers<[1], [0], [0], [1], [0, 0, 1, 1], [], []>} : vector<8x512xbf16>, vector<512x512xbf16>, vector<8x512xf32> -> vector<8x512xf32>
    %c0_41 = arith.constant 0 : index
    %c0_42 = arith.constant 0 : index
    %67 = vector.load %arg12[%c0_41, %c0_42] : memref<1x512xf32, #tpu.memory_space<vmem>>, vector<1x512xf32>
    %68 = vector.broadcast %67 : vector<1x512xf32> to vector<8x512xf32>
    %69 = arith.addf %66, %68 : vector<8x512xf32>
    %c2_i32_43 = arith.constant 2 : i32
    %70 = tpu.memref_slice %arg24[%c2_i32_43] : memref<4x!tpu.dma_semaphore, #tpu.memory_space<semaphore_mem>> -> memref<1x!tpu.dma_semaphore, #tpu.memory_space<semaphore_mem>>
    %71 = tpu.memref_squeeze %70 : memref<1x!tpu.dma_semaphore, #tpu.memory_space<semaphore_mem>> -> memref<!tpu.dma_semaphore, #tpu.memory_space<semaphore_mem>>
    tpu.wait_dma2 semaphore(%71 : memref<!tpu.dma_semaphore, #tpu.memory_space<semaphore_mem>>) src(%arg17 : memref<512x256xbf16, #tpu.memory_space<any>>) dst(%arg22 : memref<512x256xbf16, #tpu.memory_space<vmem>>)
    %72 = arith.truncf %69 : vector<8x512xf32> to vector<8x512xbf16>
    %c0_44 = arith.constant 0 : index
    %c0_45 = arith.constant 0 : index
    %73 = vector.load %arg22[%c0_44, %c0_45] : memref<512x256xbf16, #tpu.memory_space<vmem>>, vector<512x256xbf16>
    %cst_46 = arith.constant dense<0.000000e+00> : vector<8x256xf32>
    %74 = tpu.matmul %72, %73, %cst_46 {dimension_numbers = #tpu.dot_dimension_numbers<[1], [0], [0], [1], [0, 0, 1, 1], [], []>} : vector<8x512xbf16>, vector<512x256xbf16>, vector<8x256xf32> -> vector<8x256xf32>
    %c0_47 = arith.constant 0 : index
    %c0_48 = arith.constant 0 : index
    %75 = vector.load %arg13[%c0_47, %c0_48] : memref<1x256xf32, #tpu.memory_space<vmem>>, vector<1x256xf32>
    %76 = vector.broadcast %75 : vector<1x256xf32> to vector<8x256xf32>
    %77 = arith.addf %74, %76 : vector<8x256xf32>
    %cst_49 = arith.constant 0.000000e+00 : f32
    %78 = vector.broadcast %cst_49 : f32 to vector<8x256xf32>
    %79 = arith.maximumf %77, %78 : vector<8x256xf32>
    %c3_i32_50 = arith.constant 3 : i32
    %80 = tpu.memref_slice %arg24[%c3_i32_50] : memref<4x!tpu.dma_semaphore, #tpu.memory_space<semaphore_mem>> -> memref<1x!tpu.dma_semaphore, #tpu.memory_space<semaphore_mem>>
    %81 = tpu.memref_squeeze %80 : memref<1x!tpu.dma_semaphore, #tpu.memory_space<semaphore_mem>> -> memref<!tpu.dma_semaphore, #tpu.memory_space<semaphore_mem>>
    tpu.wait_dma2 semaphore(%81 : memref<!tpu.dma_semaphore, #tpu.memory_space<semaphore_mem>>) src(%arg18 : memref<256x128xbf16, #tpu.memory_space<any>>) dst(%arg23 : memref<256x128xbf16, #tpu.memory_space<vmem>>)
    %82 = arith.truncf %79 : vector<8x256xf32> to vector<8x256xbf16>
    %c0_51 = arith.constant 0 : index
    %c0_52 = arith.constant 0 : index
    %83 = vector.load %arg23[%c0_51, %c0_52] : memref<256x128xbf16, #tpu.memory_space<vmem>>, vector<256x128xbf16>
    %cst_53 = arith.constant dense<0.000000e+00> : vector<8x128xf32>
    %84 = tpu.matmul %82, %83, %cst_53 {dimension_numbers = #tpu.dot_dimension_numbers<[1], [0], [0], [1], [0, 0, 1, 1], [], []>} : vector<8x256xbf16>, vector<256x128xbf16>, vector<8x128xf32> -> vector<8x128xf32>
    %c0_54 = arith.constant 0 : index
    %c0_55 = arith.constant 0 : index
    %85 = vector.load %arg14[%c0_54, %c0_55] : memref<1x128xf32, #tpu.memory_space<vmem>>, vector<1x128xf32>
    %86 = vector.broadcast %85 : vector<1x128xf32> to vector<8x128xf32>
    %87 = arith.addf %84, %86 : vector<8x128xf32>
    %88 = arith.mulf %87, %87 : vector<8x128xf32>
    %cst_56 = arith.constant dense<0.000000e+00> : vector<8xf32>
    %89 = vector.multi_reduction <add>, %88, %cst_56 [1] : vector<8x128xf32> to vector<8xf32>
    %90 = vector.shape_cast %89 : vector<8xf32> to vector<8x1xf32>
    %cst_57 = arith.constant 9.99999996E-13 : f32
    %91 = vector.broadcast %cst_57 : f32 to vector<8x1xf32>
    %92 = arith.addf %90, %91 : vector<8x1xf32>
    %93 = math.rsqrt %92 : vector<8x1xf32>
    %94 = vector.broadcast %93 : vector<8x1xf32> to vector<8x128xf32>
    %95 = arith.mulf %87, %94 : vector<8x128xf32>
    %cst_58 = arith.constant dense<0.000000e+00> : vector<8x8xf32>
    %96 = tpu.matmul %50, %95, %cst_58 {dimension_numbers = #tpu.dot_dimension_numbers<[1], [1], [0], [0], [0, 0, 1, 0], [], []>} : vector<8x128xf32>, vector<8x128xf32>, vector<8x8xf32> -> vector<8x8xf32>
    %c0_59 = arith.constant 0 : index
    %c0_60 = arith.constant 0 : index
    %97 = vector.load %arg19[%c0_59, %c0_60] : memref<8x8xf32, #tpu.memory_space<vmem>>, vector<8x8xf32>
    tpu.vector_store %arg19[%c0_59, %c0_60], %96 {strides = array<i32>} : memref<8x8xf32, #tpu.memory_space<vmem>>, vector<8x8xf32>,
    return
  }
}

</mosaic_0001>

<llo_original>
// kernel: tpu_custom_call.1
$region0: #{tpu_custom_call.1}
  #allocation0 [shape = 'u32[]', space=smem, size = 0x4, offset = 0x4, fixed_abs, tag = 'smem constant byte address 0x4 - core index']
  #allocation1 [shape = 'u32[144,128]{1,0:T(1,128)}', space=vmem, size = 0x12000, scoped, tag = 'internal scratch']
  #allocation2 [shape = 'bf16[128,512]{1,0:T(16,128)(2,1)}', space=vmem, size = 0x20000, scoped, tag = 'scratch operand']
  #allocation3 [shape = 'bf16[512,512]{1,0:T(16,128)(2,1)}', space=vmem, size = 0x80000, scoped, tag = 'scratch operand']
  #allocation4 [shape = 'bf16[512,256]{1,0:T(16,128)(2,1)}', space=vmem, size = 0x40000, scoped, tag = 'scratch operand']
  #allocation5 [shape = 'bf16[256,128]{1,0:T(16,128)(2,1)}', space=vmem, size = 0x10000, scoped, tag = 'scratch operand']
  #allocation6 [shape = 's32[4]{0}', space=sflag, size = 0x10, scoped, tag = 'scratch operand']
  #allocation7 [shape = 'f32[1,1]{1,0:T(1,128)S(6)}', space=smem, size = 0x200, scoped, tag = 'scoped memory for tpu_custom_call.1']
  #allocation20 [shape = 's32[]', space=sflag, size = 0x4, offset = 0, fixed_abs, tag = 'sflag constant byte address 0x0 - dummy sync flag']
  #allocation22 [shape = 's32[]', space=sflag, size = 0x4, offset = 0, fixed_abs, tag = 'sflag constant byte address 0x0 - dummy sync flag']
  #allocation24 [shape = 's32[]', space=sflag, size = 0x4, offset = 0, fixed_abs, tag = 'sflag constant byte address 0x0 - dummy sync flag']
  #allocation26 [shape = 's32[]', space=sflag, size = 0x4, offset = 0, fixed_abs, tag = 'sflag constant byte address 0x0 - dummy sync flag']
  #allocation27 [shape = 's32[]', space=sflag, size = 0x4, offset = 0, fixed_abs, tag = 'sflag constant byte address 0x0 - dummy sync flag']
  #allocation28 [shape = 'u32[]', space=smem, size = 0x4, offset = 0x44, fixed_abs, tag = 'smem constant byte address 0x44 - assertion arg 0']
  #allocation29 [shape = 'u32[]', space=smem, size = 0x4, offset = 0x48, fixed_abs, tag = 'smem constant byte address 0x48 - assertion arg 1']
  %s0 = inlined_call_operand.<no memory space> [shape: f32[1,1], index: 0, kind: input, shape index: {}]
  %s1 = inlined_call_operand.hbm [shape: f32[8,128], index: 1, kind: input, shape index: {}]
  %s2 = inlined_call_operand.hbm [shape: f32[8,128], index: 2, kind: input, shape index: {}]
  %s3 = inlined_call_operand.vmem [shape: f32[8,8], index: 3, kind: input, shape index: {}]
  %s4 = inlined_call_operand.hbm [shape: f32[8,128], index: 4, kind: input, shape index: {}]
  %s5 = inlined_call_operand.hbm [shape: f32[128,128], index: 5, kind: input, shape index: {}]
  %s6 = inlined_call_operand.vmem [shape: f32[1,128], index: 6, kind: input, shape index: {}]
  %s7 = inlined_call_operand.hbm [shape: f32[128,128], index: 7, kind: input, shape index: {}]
  %s8 = inlined_call_operand.vmem [shape: f32[1,128], index: 8, kind: input, shape index: {}]
  %s9 = inlined_call_operand.hbm [shape: f32[128,128], index: 9, kind: input, shape index: {}]
  %s10 = inlined_call_operand.vmem [shape: f32[1,128], index: 10, kind: input, shape index: {}]
  %s11 = inlined_call_operand.vmem [shape: f32[1,512], index: 11, kind: input, shape index: {}]
  %s12 = inlined_call_operand.vmem [shape: f32[1,512], index: 12, kind: input, shape index: {}]
  %s13 = inlined_call_operand.vmem [shape: f32[1,256], index: 13, kind: input, shape index: {}]
  %s14 = inlined_call_operand.vmem [shape: f32[1,128], index: 14, kind: input, shape index: {}]
  %s15 = inlined_call_operand.hbm [shape: bf16[128,512], index: 15, kind: input, shape index: {}]
  %s16 = inlined_call_operand.hbm [shape: bf16[512,512], index: 16, kind: input, shape index: {}]
  %s17 = inlined_call_operand.hbm [shape: bf16[512,256], index: 17, kind: input, shape index: {}]
  %s18 = inlined_call_operand.hbm [shape: bf16[256,128], index: 18, kind: input, shape index: {}]
  %s19 = inlined_call_operand.hbm [shape: f32[8,8], index: 19, kind: output, shape index: {}]
  %s20 = sld [smem:[#allocation0]]
  $region98: #{tpu_custom_call.1} parent=0
    _
  %s22 = ssub.s32 1, %s20
  %s23 = scalar_select 0, %s22, %s20
  %24 = sst [smem:[#allocation7]] %s0
  $region1: #{tpu_custom_call.1} parent=0
    #allocation8 [shape = 'u8[4096]{0}', space=vmem, size = 0x1000, scoped, tag = 'input window, operand 1, single buffered']
    #allocation9 [shape = 's32[1]{0}', space=sflag, size = 0x4, scoped, tag = 'scoped memory for tpu_custom_call.1']
    #allocation10 [shape = 's32[1]{0}', space=sflag, size = 0x4, scoped, tag = 'scoped memory for tpu_custom_call.1']
    #allocation11 [shape = 'u8[4096]{0}', space=vmem, size = 0x1000, scoped, tag = 'input window, operand 2, single buffered']
    #allocation12 [shape = 's32[1]{0}', space=sflag, size = 0x4, scoped, tag = 'scoped memory for tpu_custom_call.1']
    #allocation13 [shape = 'u8[4096]{0}', space=vmem, size = 0x1000, scoped, tag = 'input window, operand 4, single buffered']
    #allocation14 [shape = 'u8[65536]{0}', space=vmem, size = 0x10000, scoped, tag = 'input window, operand 5, single buffered']
    #allocation15 [shape = 's32[1]{0}', space=sflag, size = 0x4, scoped, tag = 'scoped memory for tpu_custom_call.1']
    #allocation16 [shape = 'u8[65536]{0}', space=vmem, size = 0x10000, scoped, tag = 'input window, operand 7, single buffered']
    #allocation17 [shape = 'u8[65536]{0}', space=vmem, size = 0x10000, scoped, tag = 'input window, operand 9, single buffered']
    #allocation18 [shape = 's32[1]{0}', space=sflag, size = 0x4, scoped, tag = 'scoped memory for tpu_custom_call.1']
    #allocation19 [shape = 'u8[4096]{0}', space=vmem, size = 0x1000, scoped, tag = 'output window, operand 0, single buffered']
    #allocation21 [shape = 'u32[9]{0}', space=smem, size = 0x24, scoped, tag = 'DMA stride descriptor']
    #allocation23 [shape = 'u32[9]{0}', space=smem, size = 0x24, scoped, tag = 'DMA stride descriptor']
    #allocation25 [shape = 'u32[9]{0}', space=smem, size = 0x24, scoped, tag = 'DMA stride descriptor']
    %25 = vsyncpa [#allocation9], 0
    %26 = vsyncpa [#allocation12], 0
    %27 = vsyncpa [#allocation15], 0
    %28 = vsyncpa [#allocation18], 0
    %29 = vsyncpa [#allocation10], 0
    // Predicated region
    $region2: #{tpu_custom_call.1} parent=1 // pred_check
      _
    $region3: #{tpu_custom_call.1} parent=1 // pred_check_branch
      %31 = sbr.rel (0) target = $region5
    $region4: #{tpu_custom_call.1} parent=1 // pred_region
      _
    $region5: #{tpu_custom_call.1} parent=1 // pred_fallthru
      _
    // Predicated region
    $region6: #{tpu_custom_call.1} parent=1 // pred_check
      _
    $region7: #{tpu_custom_call.1} parent=1 // pred_check_branch
      %33 = sbr.rel (0) target = $region9
    $region8: #{tpu_custom_call.1} parent=1 // pred_region
      %s35 = ssub.s32 128, 128
      %36 = vsyncadd [#allocation9], %s35
      %s38 = sshll.u32 [#allocation8], 4
      %s39 = int_to_ptr.vmem [resolvable:$true] %s38
      %41 = dma.hbm_to_vmem [thread:$0]  %s1, 128, %s39, [#allocation9]
    $region9: #{tpu_custom_call.1} parent=1 // pred_fallthru
      _
    // Predicated region
    $region10: #{tpu_custom_call.1} parent=1 // pred_check
      _
    $region11: #{tpu_custom_call.1} parent=1 // pred_check_branch
      %43 = sbr.rel (0) target = $region13
    $region12: #{tpu_custom_call.1} parent=1 // pred_region
      %s45 = ssub.s32 128, 128
      %46 = vsyncadd [#allocation12], %s45
      %s48 = sshll.u32 [#allocation11], 4
      %s49 = int_to_ptr.vmem [resolvable:$true] %s48
      %51 = dma.hbm_to_vmem [thread:$0]  %s2, 128, %s49, [#allocation12]
    $region13: #{tpu_custom_call.1} parent=1 // pred_fallthru
      _
    // Predicated region
    $region14: #{tpu_custom_call.1} parent=1 // pred_check
      _
    $region15: #{tpu_custom_call.1} parent=1 // pred_check_branch
      %53 = sbr.rel (0) target = $region17
    $region16: #{tpu_custom_call.1} parent=1 // pred_region
      _
    $region17: #{tpu_custom_call.1} parent=1 // pred_fallthru
      _
    // Predicated region
    $region18: #{tpu_custom_call.1} parent=1 // pred_check
      _
    $region19: #{tpu_custom_call.1} parent=1 // pred_check_branch
      %55 = sbr.rel (0) target = $region21
    $region20: #{tpu_custom_call.1} parent=1 // pred_region
      %s57 = ssub.s32 128, 128
      %58 = vsyncadd [#allocation12], %s57
      %s60 = sshll.u32 [#allocation13], 4
      %s61 = int_to_ptr.vmem [resolvable:$true] %s60
      %63 = dma.hbm_to_vmem [thread:$0]  %s4, 128, %s61, [#allocation12]
    $region21: #{tpu_custom_call.1} parent=1 // pred_fallthru
      _
    // Predicated region
    $region22: #{tpu_custom_call.1} parent=1 // pred_check
      _
    $region23: #{tpu_custom_call.1} parent=1 // pred_check_branch
      %65 = sbr.rel (0) target = $region25
    $region24: #{tpu_custom_call.1} parent=1 // pred_region
      %s67 = ssub.s32 2048, 2048
      %68 = vsyncadd [#allocation15], %s67
      %s69 = sshll.u32 [#allocation14], 4
      %s70 = int_to_ptr.vmem [resolvable:$true] %s69
      %75 = dma.hbm_to_vmem [thread:$0]  %s5, 2048, %s70, [#allocation15], 128, 128, 8
    $region25: #{tpu_custom_call.1} parent=1 // pred_fallthru
      _
    // Predicated region
    $region26: #{tpu_custom_call.1} parent=1 // pred_check
      _
    $region27: #{tpu_custom_call.1} parent=1 // pred_check_branch
      %77 = sbr.rel (0) target = $region29
    $region28: #{tpu_custom_call.1} parent=1 // pred_region
      _
    $region29: #{tpu_custom_call.1} parent=1 // pred_fallthru
      _
    // Predicated region
    $region30: #{tpu_custom_call.1} parent=1 // pred_check
      _
    $region31: #{tpu_custom_call.1} parent=1 // pred_check_branch
      %79 = sbr.rel (0) target = $region33
    $region32: #{tpu_custom_call.1} parent=1 // pred_region
      %s81 = ssub.s32 2048, 2048
      %82 = vsyncadd [#allocation15], %s81
      %s83 = sshll.u32 [#allocation16], 4
      %s84 = int_to_ptr.vmem [resolvable:$true] %s83
      %89 = dma.hbm_to_vmem [thread:$0]  %s7, 2048, %s84, [#allocation15], 128, 128, 8
    $region33: #{tpu_custom_call.1} parent=1 // pred_fallthru
      _
    // Predicated region
    $region34: #{tpu_custom_call.1} parent=1 // pred_check
      _
    $region35: #{tpu_custom_call.1} parent=1 // pred_check_branch
      %91 = sbr.rel (0) target = $region37
    $region36: #{tpu_custom_call.1} parent=1 // pred_region
      _
    $region37: #{tpu_custom_call.1} parent=1 // pred_fallthru
      _
    // Predicated region
    $region38: #{tpu_custom_call.1} parent=1 // pred_check
      _
    $region39: #{tpu_custom_call.1} parent=1 // pred_check_branch
      %93 = sbr.rel (0) target = $region41
    $region40: #{tpu_custom_call.1} parent=1 // pred_region
      %s95 = ssub.s32 2048, 2048
      %96 = vsyncadd [#allocation18], %s95
      %s97 = sshll.u32 [#allocation17], 4
      %s98 = int_to_ptr.vmem [resolvable:$true] %s97
      %103 = dma.hbm_to_vmem [thread:$0]  %s9, 2048, %s98, [#allocation18], 128, 128, 8
    $region41: #{tpu_custom_call.1} parent=1 // pred_fallthru
      _
    // Predicated region
    $region42: #{tpu_custom_call.1} parent=1 // pred_check
      _
    $region43: #{tpu_custom_call.1} parent=1 // pred_check_branch
      %105 = sbr.rel (0) target = $region45
    $region44: #{tpu_custom_call.1} parent=1 // pred_region
      _
    $region45: #{tpu_custom_call.1} parent=1 // pred_fallthru
      _
    // Predicated region
    $region46: #{tpu_custom_call.1} parent=1 // pred_check
      _
    $region47: #{tpu_custom_call.1} parent=1 // pred_check_branch
      %107 = sbr.rel (0) target = $region49
    $region48: #{tpu_custom_call.1} parent=1 // pred_region
      _
    $region49: #{tpu_custom_call.1} parent=1 // pred_fallthru
      _
    // Predicated region
    $region50: #{tpu_custom_call.1} parent=1 // pred_check
      _
    $region51: #{tpu_custom_call.1} parent=1 // pred_check_branch
      %109 = sbr.rel (0) target = $region53
    $region52: #{tpu_custom_call.1} parent=1 // pred_region
      _
    $region53: #{tpu_custom_call.1} parent=1 // pred_fallthru
      _
    // Predicated region
    $region54: #{tpu_custom_call.1} parent=1 // pred_check
      _
    $region55: #{tpu_custom_call.1} parent=1 // pred_check_branch
      %111 = sbr.rel (0) target = $region57
    $region56: #{tpu_custom_call.1} parent=1 // pred_region
      _
    $region57: #{tpu_custom_call.1} parent=1 // pred_fallthru
      _
    // Predicated region
    $region58: #{tpu_custom_call.1} parent=1 // pred_check
      _
    $region59: #{tpu_custom_call.1} parent=1 // pred_check_branch
      %113 = sbr.rel (0) target = $region61
    $region60: #{tpu_custom_call.1} parent=1 // pred_region
      _
    $region61: #{tpu_custom_call.1} parent=1 // pred_fallthru
      _
    // Predicated region
    $region62: #{tpu_custom_call.1} parent=1 // pred_check
      _
    $region63: #{tpu_custom_call.1} parent=1 // pred_check_branch
      %115 = sbr.rel (0) target = $region65
    $region64: #{tpu_custom_call.1} parent=1 // pred_region
      %116 = dma.done [#allocation9], 128
    $region65: #{tpu_custom_call.1} parent=1 // pred_fallthru
      _
    // Predicated region
    $region66: #{tpu_custom_call.1} parent=1 // pred_check
      _
    $region67: #{tpu_custom_call.1} parent=1 // pred_check_branch
      %118 = sbr.rel (0) target = $region69
    $region68: #{tpu_custom_call.1} parent=1 // pred_region
      %119 = dma.done [#allocation12], 128
    $region69: #{tpu_custom_call.1} parent=1 // pred_fallthru
      _
    // Predicated region
    $region70: #{tpu_custom_call.1} parent=1 // pred_check
      _
    $region71: #{tpu_custom_call.1} parent=1 // pred_check_branch
      %121 = sbr.rel (0) target = $region73
    $region72: #{tpu_custom_call.1} parent=1 // pred_region
      %122 = dma.done [#allocation12], 128
    $region73: #{tpu_custom_call.1} parent=1 // pred_fallthru
      _
    // Predicated region
    $region74: #{tpu_custom_call.1} parent=1 // pred_check
      _
    $region75: #{tpu_custom_call.1} parent=1 // pred_check_branch
      %124 = sbr.rel (0) target = $region77
    $region76: #{tpu_custom_call.1} parent=1 // pred_region
      %125 = dma.done [#allocation15], 2048
    $region77: #{tpu_custom_call.1} parent=1 // pred_fallthru
      _
    // Predicated region
    $region78: #{tpu_custom_call.1} parent=1 // pred_check
      _
    $region79: #{tpu_custom_call.1} parent=1 // pred_check_branch
      %127 = sbr.rel (0) target = $region81
    $region80: #{tpu_custom_call.1} parent=1 // pred_region
      %128 = dma.done [#allocation15], 2048
    $region81: #{tpu_custom_call.1} parent=1 // pred_fallthru
      _
    // Predicated region
    $region82: #{tpu_custom_call.1} parent=1 // pred_check
      _
    $region83: #{tpu_custom_call.1} parent=1 // pred_check_branch
      %130 = sbr.rel (0) target = $region85
    $region84: #{tpu_custom_call.1} parent=1 // pred_region
      %131 = dma.done [#allocation18], 2048
    $region85: #{tpu_custom_call.1} parent=1 // pred_fallthru
      _
    %s134 = sshll.u32 1, 14
    %s135 = sxor.u32 4294967295, %s134
    %s137 = sld [smem:[#allocation0]]
    %s138 = sadd.s32 2, %s137
    %s140 = sshll.u32 7, 26
    %s141 = sxor.u32 4294967295, %s140
    %s142 = sand.u32 0, %s141
    %s143 = sshll.u32 %s138, 26
    %s144 = sor.u32 %s142, %s143
    %s145 = sshll.u32 [#allocation2], 4
    %s146 = int_to_ptr.vmem [resolvable:$true] %s145
    %149 = sst [smem:[#allocation21]] 512
    %s150 = scalar_lea.smem [#allocation21], 1
    %151 = sst [smem:[%s150]] 512
    %s152 = scalar_lea.smem [#allocation21], 2
    %153 = sst [smem:[%s152]] 4
    %s154 = scalar_lea.smem [#allocation21], 3
    %155 = sst [smem:[%s154]] 64
    %s156 = scalar_lea.smem [#allocation21], 4
    %157 = sst [smem:[%s156]] 128
    %s158 = scalar_lea.smem [#allocation21], 5
    %159 = sst [smem:[%s158]] 2
    %s160 = scalar_lea.smem [#allocation21], 6
    %161 = sst [smem:[%s160]] 256
    %s162 = scalar_lea.smem [#allocation21], 7
    %163 = sst [smem:[%s162]] 64
    %s164 = scalar_lea.smem [#allocation21], 8
    %165 = sst [smem:[%s164]] 4
    %167 = dma.general %s15, 4096, %s146, [#allocation6], [#allocation20], [#allocation21], %s144, 0
    %s168 = scalar_lea.sflag [#allocation6], 1
    %s170 = sshll.u32 1, 14
    %s171 = sxor.u32 4294967295, %s170
    %s173 = sadd.s32 2, %s137
    %s175 = sshll.u32 7, 26
    %s176 = sxor.u32 4294967295, %s175
    %s177 = sand.u32 0, %s176
    %s178 = sshll.u32 %s173, 26
    %s179 = sor.u32 %s177, %s178
    %s180 = sshll.u32 [#allocation3], 4
    %s181 = int_to_ptr.vmem [resolvable:$true] %s180
    %184 = sst [smem:[#allocation23]] 512
    %s185 = scalar_lea.smem [#allocation23], 1
    %186 = sst [smem:[%s185]] 512
    %s187 = scalar_lea.smem [#allocation23], 2
    %188 = sst [smem:[%s187]] 4
    %s189 = scalar_lea.smem [#allocation23], 3
    %190 = sst [smem:[%s189]] 64
    %s191 = scalar_lea.smem [#allocation23], 4
    %192 = sst [smem:[%s191]] 128
    %s193 = scalar_lea.smem [#allocation23], 5
    %194 = sst [smem:[%s193]] 2
    %s195 = scalar_lea.smem [#allocation23], 6
    %196 = sst [smem:[%s195]] 256
    %s197 = scalar_lea.smem [#allocation23], 7
    %198 = sst [smem:[%s197]] 64
    %s199 = scalar_lea.smem [#allocation23], 8
    %200 = sst [smem:[%s199]] 4
    %202 = dma.general %s16, 16384, %s181, %s168, [#allocation22], [#allocation23], %s179, 0
    %s203 = scalar_lea.sflag [#allocation6], 2
    %s205 = sshll.u32 1, 14
    %s206 = sxor.u32 4294967295, %s205
    %s208 = sadd.s32 2, %s137
    %s210 = sshll.u32 7, 26
    %s211 = sxor.u32 4294967295, %s210
    %s212 = sand.u32 0, %s211
    %s213 = sshll.u32 %s208, 26
    %s214 = sor.u32 %s212, %s213
    %s215 = sshll.u32 [#allocation4], 4
    %s216 = int_to_ptr.vmem [resolvable:$true] %s215
    %219 = sst [smem:[#allocation25]] 256
    %s220 = scalar_lea.smem [#allocation25], 1
    %221 = sst [smem:[%s220]] 256
    %s222 = scalar_lea.smem [#allocation25], 2
    %223 = sst [smem:[%s222]] 2
    %s224 = scalar_lea.smem [#allocation25], 3
    %225 = sst [smem:[%s224]] 64
    %s226 = scalar_lea.smem [#allocation25], 4
    %227 = sst [smem:[%s226]] 128
    %s228 = scalar_lea.smem [#allocation25], 5
    %229 = sst [smem:[%s228]] 2
    %s230 = scalar_lea.smem [#allocation25], 6
    %231 = sst [smem:[%s230]] 128
    %s232 = scalar_lea.smem [#allocation25], 7
    %233 = sst [smem:[%s232]] 64
    %s234 = scalar_lea.smem [#allocation25], 8
    %235 = sst [smem:[%s234]] 4
    %237 = dma.general %s17, 8192, %s216, %s203, [#allocation24], [#allocation25], %s214, 0
    %s238 = scalar_lea.sflag [#allocation6], 3
    // Predicated region
    $region86: #{tpu_custom_call.1} parent=1 // pred_check
      _
    $region87: #{tpu_custom_call.1} parent=1 // pred_check_branch
      %240 = sbr.rel target = $region89
    $region88: #{tpu_custom_call.1} parent=1 // pred_region
      %241 = sst [smem:[#allocation28]] [#allocation27]
      %242 = sst [smem:[#allocation29]] [#allocation26]
    $region89: #{tpu_custom_call.1} parent=1 // pred_fallthru
      _
    %244 = shalt.err (0)
    %s246 = sshll.u32 [#allocation5], 4
    %s247 = int_to_ptr.vmem [resolvable:$true] %s246
    %249 = dma.hbm_to_vmem [thread:$0]  %s18, 2048, %s247, %s238
    %v250 = vld [vmem:[#allocation8] sm:$0xff]
    %v251 = vld [vmem:[#allocation11] sm:$0xff]
    %v252 = vld [vmem:[#allocation14] sm:$0xff]
    %v253 = vld [vmem:[#allocation14 + $0x8] sm:$0xff]
    %v254 = vld [vmem:[#allocation14 + $0x10] sm:$0xff]
    %v255 = vld [vmem:[#allocation14 + $0x18] sm:$0xff]
    %v256 = vld [vmem:[#allocation14 + $0x20] sm:$0xff]
    %v257 = vld [vmem:[#allocation14 + $0x28] sm:$0xff]
    %v258 = vld [vmem:[#allocation14 + $0x30] sm:$0xff]
    %v259 = vld [vmem:[#allocation14 + $0x38] sm:$0xff]
    %v260 = vld [vmem:[#allocation14 + $0x40] sm:$0xff]
    %v261 = vld [vmem:[#allocation14 + $0x48] sm:$0xff]
    %v262 = vld [vmem:[#allocation14 + $0x50] sm:$0xff]
    %v263 = vld [vmem:[#allocation14 + $0x58] sm:$0xff]
    %v264 = vld [vmem:[#allocation14 + $0x60] sm:$0xff]
    %v265 = vld [vmem:[#allocation14 + $0x68] sm:$0xff]
    %v266 = vld [vmem:[#allocation14 + $0x70] sm:$0xff]
    %v267 = vld [vmem:[#allocation14 + $0x78] sm:$0xff]
    %v268 = vld [vmem:[%s6] sm:$0x1]
    %v270 = vlaneseq
    %v271 = vshrl.u32 %v270, 7
    %v272 = vsub.s32 0, %v271
    %v273 = vrot.slane %v268, %v272
    %275 = vmatprep.subr.mxu0 0.0
    %276 = vmatpush1.msra.mxu0 %v252
    %277 = vmatprep.subr.mxu0 0.0
    %278 = vmatpush1.msra.mxu0 %v253
    %279 = vmatprep.subr.mxu0 0.0
    %280 = vmatpush1.msra.mxu0 %v254
    %281 = vmatprep.subr.mxu0 0.0
    %282 = vmatpush1.msra.mxu0 %v255
    %283 = vmatprep.subr.mxu0 0.0
    %284 = vmatpush1.msra.mxu0 %v256
    %285 = vmatprep.subr.mxu0 0.0
    %286 = vmatpush1.msra.mxu0 %v257
    %287 = vmatprep.subr.mxu0 0.0
    %288 = vmatpush1.msra.mxu0 %v258
    %289 = vmatprep.subr.mxu0 0.0
    %290 = vmatpush1.msra.mxu0 %v259
    %291 = vmatprep.subr.mxu0 0.0
    %292 = vmatpush1.msra.mxu0 %v260
    %293 = vmatprep.subr.mxu0 0.0
    %294 = vmatpush1.msra.mxu0 %v261
    %295 = vmatprep.subr.mxu0 0.0
    %296 = vmatpush1.msra.mxu0 %v262
    %297 = vmatprep.subr.mxu0 0.0
    %298 = vmatpush1.msra.mxu0 %v263
    %299 = vmatprep.subr.mxu0 0.0
    %300 = vmatpush1.msra.mxu0 %v264
    %301 = vmatprep.subr.mxu0 0.0
    %302 = vmatpush1.msra.mxu0 %v265
    %303 = vmatprep.subr.mxu0 0.0
    %304 = vmatpush1.msra.mxu0 %v266
    %305 = vmatprep.subr.mxu0 0.0
    %306 = vmatpush1.msra.mxu0 %v267
    %307 = vmatprep.subr.mxu0 0.0
    %308 = vmatpush1.msra.mxu0 0.0
    %309 = vmatprep.subr.mxu0 0.0
    %310 = vmatpush1.msra.mxu0 0.0
    %311 = vmatprep.subr.mxu0 0.0
    %312 = vmatpush1.msra.mxu0 0.0
    %313 = vmatprep.subr.mxu0 0.0
    %314 = vmatpush1.msra.mxu0 0.0
    %315 = vmatprep.subr.mxu0 0.0
    %316 = vmatpush1.msra.mxu0 0.0
    %317 = vmatprep.subr.mxu0 0.0
    %318 = vmatpush1.msra.mxu0 0.0
    %319 = vmatprep.subr.mxu0 0.0
    %320 = vmatpush1.msra.mxu0 0.0
    %321 = vmatprep.subr.mxu0 0.0
    %322 = vmatpush1.msra.mxu0 0.0
    %323 = vmatprep.subr.mxu0 0.0
    %324 = vmatpush1.msra.mxu0 0.0
    %325 = vmatprep.subr.mxu0 0.0
    %326 = vmatpush1.msra.mxu0 0.0
    %327 = vmatprep.subr.mxu0 0.0
    %328 = vmatpush1.msra.mxu0 0.0
    %329 = vmatprep.subr.mxu0 0.0
    %330 = vmatpush1.msra.mxu0 0.0
    %331 = vmatprep.subr.mxu0 0.0
    %332 = vmatpush1.msra.mxu0 0.0
    %333 = vmatprep.subr.mxu0 0.0
    %334 = vmatpush1.msra.mxu0 0.0
    %335 = vmatprep.subr.mxu0 0.0
    %336 = vmatpush1.msra.mxu0 0.0
    %337 = vmatprep.subr.mxu0 0.0
    %338 = vmatpush1.msra.mxu0 0.0
    %339 = vmatprep.mubr.f32.mxu0 0.0
    %340 = vmatmul.mubr.f32.gmra.mrb[0].mxu0 %v250
    %v341 = vpop.f32.mrb[0].mxu0
    %v342 = vadd.f32 %v273, %v341
    %v343 = vpop.f32.mrb[0].mxu0
    %344 = vdwg.mxu0
    %v345 = vld [vmem:[#allocation16] sm:$0xff]
    %v346 = vld [vmem:[#allocation16 + $0x8] sm:$0xff]
    %v347 = vld [vmem:[#allocation16 + $0x10] sm:$0xff]
    %v348 = vld [vmem:[#allocation16 + $0x18] sm:$0xff]
    %v349 = vld [vmem:[#allocation16 + $0x20] sm:$0xff]
    %v350 = vld [vmem:[#allocation16 + $0x28] sm:$0xff]
    %v351 = vld [vmem:[#allocation16 + $0x30] sm:$0xff]
    %v352 = vld [vmem:[#allocation16 + $0x38] sm:$0xff]
    %v353 = vld [vmem:[#allocation16 + $0x40] sm:$0xff]
    %v354 = vld [vmem:[#allocation16 + $0x48] sm:$0xff]
    %v355 = vld [vmem:[#allocation16 + $0x50] sm:$0xff]
    %v356 = vld [vmem:[#allocation16 + $0x58] sm:$0xff]
    %v357 = vld [vmem:[#allocation16 + $0x60] sm:$0xff]
    %v358 = vld [vmem:[#allocation16 + $0x68] sm:$0xff]
    %v359 = vld [vmem:[#allocation16 + $0x70] sm:$0xff]
    %v360 = vld [vmem:[#allocation16 + $0x78] sm:$0xff]
    %v361 = vld [vmem:[%s8] sm:$0x1]
    %v363 = vlaneseq
    %v364 = vshrl.u32 %v363, 7
    %v365 = vsub.s32 0, %v364
    %v366 = vrot.slane %v361, %v365
    %368 = vmatprep.subr.mxu0 0.0
    %369 = vmatpush1.msra.mxu0 %v345
    %370 = vmatprep.subr.mxu0 0.0
    %371 = vmatpush1.msra.mxu0 %v346
    %372 = vmatprep.subr.mxu0 0.0
    %373 = vmatpush1.msra.mxu0 %v347
    %374 = vmatprep.subr.mxu0 0.0
    %375 = vmatpush1.msra.mxu0 %v348
    %376 = vmatprep.subr.mxu0 0.0
    %377 = vmatpush1.msra.mxu0 %v349
    %378 = vmatprep.subr.mxu0 0.0
    %379 = vmatpush1.msra.mxu0 %v350
    %380 = vmatprep.subr.mxu0 0.0
    %381 = vmatpush1.msra.mxu0 %v351
    %382 = vmatprep.subr.mxu0 0.0
    %383 = vmatpush1.msra.mxu0 %v352
    %384 = vmatprep.subr.mxu0 0.0
    %385 = vmatpush1.msra.mxu0 %v353
    %386 = vmatprep.subr.mxu0 0.0
    %387 = vmatpush1.msra.mxu0 %v354
    %388 = vmatprep.subr.mxu0 0.0
    %389 = vmatpush1.msra.mxu0 %v355
    %390 = vmatprep.subr.mxu0 0.0
    %391 = vmatpush1.msra.mxu0 %v356
    %392 = vmatprep.subr.mxu0 0.0
    %393 = vmatpush1.msra.mxu0 %v357
    %394 = vmatprep.subr.mxu0 0.0
    %395 = vmatpush1.msra.mxu0 %v358
    %396 = vmatprep.subr.mxu0 0.0
    %397 = vmatpush1.msra.mxu0 %v359
    %398 = vmatprep.subr.mxu0 0.0
    %399 = vmatpush1.msra.mxu0 %v360
    %400 = vmatprep.subr.mxu0 0.0
    %401 = vmatpush1.msra.mxu0 0.0
    %402 = vmatprep.subr.mxu0 0.0
    %403 = vmatpush1.msra.mxu0 0.0
    %404 = vmatprep.subr.mxu0 0.0
    %405 = vmatpush1.msra.mxu0 0.0
    %406 = vmatprep.subr.mxu0 0.0
    %407 = vmatpush1.msra.mxu0 0.0
    %408 = vmatprep.subr.mxu0 0.0
    %409 = vmatpush1.msra.mxu0 0.0
    %410 = vmatprep.subr.mxu0 0.0
    %411 = vmatpush1.msra.mxu0 0.0
    %412 = vmatprep.subr.mxu0 0.0
    %413 = vmatpush1.msra.mxu0 0.0
    %414 = vmatprep.subr.mxu0 0.0
    %415 = vmatpush1.msra.mxu0 0.0
    %416 = vmatprep.subr.mxu0 0.0
    %417 = vmatpush1.msra.mxu0 0.0
    %418 = vmatprep.subr.mxu0 0.0
    %419 = vmatpush1.msra.mxu0 0.0
    %420 = vmatprep.subr.mxu0 0.0
    %421 = vmatpush1.msra.mxu0 0.0
    %422 = vmatprep.subr.mxu0 0.0
    %423 = vmatpush1.msra.mxu0 0.0
    %424 = vmatprep.subr.mxu0 0.0
    %425 = vmatpush1.msra.mxu0 0.0
    %426 = vmatprep.subr.mxu0 0.0
    %427 = vmatpush1.msra.mxu0 0.0
    %428 = vmatprep.subr.mxu0 0.0
    %429 = vmatpush1.msra.mxu0 0.0
    %430 = vmatprep.subr.mxu0 0.0
    %431 = vmatpush1.msra.mxu0 0.0
    %432 = vmatprep.mubr.f32.mxu0 0.0
    %433 = vmatmul.mubr.f32.gmra.mrb[0].mxu0 %v251
    %v434 = vpop.f32.mrb[0].mxu0
    %v435 = vadd.f32 %v366, %v434
    %v436 = vpop.f32.mrb[0].mxu0
    %437 = vdwg.mxu0
    %438 = vmatprep.subr.mxu0 0.0
    %439 = vmatpush1.xpose.msra.mxu0 %v435
    %440 = vmatprep.subr.mxu0 0.0
    %441 = vmatpush1.xpose.msra.mxu0 0.0
    %442 = vmatprep.subr.mxu0 0.0
    %443 = vmatpush1.xpose.msra.mxu0 0.0
    %444 = vmatprep.subr.mxu0 0.0
    %445 = vmatpush1.xpose.msra.mxu0 0.0
    %446 = vmatprep.subr.mxu0 0.0
    %447 = vmatpush1.xpose.msra.mxu0 0.0
    %448 = vmatprep.subr.mxu0 0.0
    %449 = vmatpush1.xpose.msra.mxu0 0.0
    %450 = vmatprep.subr.mxu0 0.0
    %451 = vmatpush1.xpose.msra.mxu0 0.0
    %452 = vmatprep.subr.mxu0 0.0
    %453 = vmatpush1.xpose.msra.mxu0 0.0
    %454 = vmatprep.subr.mxu0 0.0
    %455 = vmatpush1.xpose.msra.mxu0 0.0
    %456 = vmatprep.subr.mxu0 0.0
    %457 = vmatpush1.xpose.msra.mxu0 0.0
    %458 = vmatprep.subr.mxu0 0.0
    %459 = vmatpush1.xpose.msra.mxu0 0.0
    %460 = vmatprep.subr.mxu0 0.0
    %461 = vmatpush1.xpose.msra.mxu0 0.0
    %462 = vmatprep.subr.mxu0 0.0
    %463 = vmatpush1.xpose.msra.mxu0 0.0
    %464 = vmatprep.subr.mxu0 0.0
    %465 = vmatpush1.xpose.msra.mxu0 0.0
    %466 = vmatprep.subr.mxu0 0.0
    %467 = vmatpush1.xpose.msra.mxu0 0.0
    %468 = vmatprep.subr.mxu0 0.0
    %469 = vmatpush1.xpose.msra.mxu0 0.0
    %470 = vmatprep.subr.mxu0 0.0
    %471 = vmatpush1.xpose.msra.mxu0 0.0
    %472 = vmatprep.subr.mxu0 0.0
    %473 = vmatpush1.xpose.msra.mxu0 0.0
    %474 = vmatprep.subr.mxu0 0.0
    %475 = vmatpush1.xpose.msra.mxu0 0.0
    %476 = vmatprep.subr.mxu0 0.0
    %477 = vmatpush1.xpose.msra.mxu0 0.0
    %478 = vmatprep.subr.mxu0 0.0
    %479 = vmatpush1.xpose.msra.mxu0 0.0
    %480 = vmatprep.subr.mxu0 0.0
    %481 = vmatpush1.xpose.msra.mxu0 0.0
    %482 = vmatprep.subr.mxu0 0.0
    %483 = vmatpush1.xpose.msra.mxu0 0.0
    %484 = vmatprep.subr.mxu0 0.0
    %485 = vmatpush1.xpose.msra.mxu0 0.0
    %486 = vmatprep.subr.mxu0 0.0
    %487 = vmatpush1.xpose.msra.mxu0 0.0
    %488 = vmatprep.subr.mxu0 0.0
    %489 = vmatpush1.xpose.msra.mxu0 0.0
    %490 = vmatprep.subr.mxu0 0.0
    %491 = vmatpush1.xpose.msra.mxu0 0.0
    %492 = vmatprep.subr.mxu0 0.0
    %493 = vmatpush1.xpose.msra.mxu0 0.0
    %494 = vmatprep.subr.mxu0 0.0
    %495 = vmatpush1.xpose.msra.mxu0 0.0
    %496 = vmatprep.subr.mxu0 0.0
    %497 = vmatpush1.xpose.msra.mxu0 0.0
    %498 = vmatprep.subr.mxu0 0.0
    %499 = vmatpush1.xpose.msra.mxu0 0.0
    %500 = vmatprep.subr.mxu0 0.0
    %501 = vmatpush1.xpose.msra.mxu0 0.0
    %502 = vmatprep.mubr.f32.mxu0 0.0
    %503 = vmatmul.mubr.f32.gmra.mrb[0].mxu0 %v342
    %v504 = vpop.f32.mrb[0].mxu0
    %v505 = vadd.f32 0.0, %v504
    %v506 = vpop.f32.mrb[0].mxu0
    %507 = vdwg.mxu0
    %v508 = vmul.f32 %v505, 0.17677669
    %v509 = vld [vmem:[%s3] sm:$0xff]
    %v510 = vadd.f32 %v508, %v509
    %vm511 = vcmask 64512
    %v512 = vsel %vm511, %v510, -inf
    %513 = vmax.xlane.f32.xlu0 %v512
    %v514 = vpop.xlane.xlu0 %513
    %v515 = vsub.f32 %v510, %v514
    %v516 = vmul.f32 %v515, 1.442695
    %v517 = vpow.pop %v516
    %v518 = vsel %vm511, %v517, 0.0
    %519 = vadd.xlane.f32.xlu0 %v518
    %v520 = vpop.xlane.xlu0 %519
    %v521 = vrcp.pop %v520
    %v522 = vmul.f32 %v517, %v521
    %v524 = vsel %vm511, %v522, 0
    %526 = vmatprep.subr.mxu0 0.0
    %527 = vmatpush1.msra.mxu0 %v251
    %528 = vmatprep.subr.mxu0 0.0
    %529 = vmatpush1.msra.mxu0 0.0
    %530 = vmatprep.subr.mxu0 0.0
    %531 = vmatpush1.msra.mxu0 0.0
    %532 = vmatprep.subr.mxu0 0.0
    %533 = vmatpush1.msra.mxu0 0.0
    %534 = vmatprep.subr.mxu0 0.0
    %535 = vmatpush1.msra.mxu0 0.0
    %536 = vmatprep.subr.mxu0 0.0
    %537 = vmatpush1.msra.mxu0 0.0
    %538 = vmatprep.subr.mxu0 0.0
    %539 = vmatpush1.msra.mxu0 0.0
    %540 = vmatprep.subr.mxu0 0.0
    %541 = vmatpush1.msra.mxu0 0.0
    %542 = vmatprep.subr.mxu0 0.0
    %543 = vmatpush1.msra.mxu0 0.0
    %544 = vmatprep.subr.mxu0 0.0
    %545 = vmatpush1.msra.mxu0 0.0
    %546 = vmatprep.subr.mxu0 0.0
    %547 = vmatpush1.msra.mxu0 0.0
    %548 = vmatprep.subr.mxu0 0.0
    %549 = vmatpush1.msra.mxu0 0.0
    %550 = vmatprep.subr.mxu0 0.0
    %551 = vmatpush1.msra.mxu0 0.0
    %552 = vmatprep.subr.mxu0 0.0
    %553 = vmatpush1.msra.mxu0 0.0
    %554 = vmatprep.subr.mxu0 0.0
    %555 = vmatpush1.msra.mxu0 0.0
    %556 = vmatprep.subr.mxu0 0.0
    %557 = vmatpush1.msra.mxu0 0.0
    %558 = vmatprep.subr.mxu0 0.0
    %559 = vmatpush1.msra.mxu0 0.0
    %560 = vmatprep.subr.mxu0 0.0
    %561 = vmatpush1.msra.mxu0 0.0
    %562 = vmatprep.subr.mxu0 0.0
    %563 = vmatpush1.msra.mxu0 0.0
    %564 = vmatprep.subr.mxu0 0.0
    %565 = vmatpush1.msra.mxu0 0.0
    %566 = vmatprep.subr.mxu0 0.0
    %567 = vmatpush1.msra.mxu0 0.0
    %568 = vmatprep.subr.mxu0 0.0
    %569 = vmatpush1.msra.mxu0 0.0
    %570 = vmatprep.subr.mxu0 0.0
    %571 = vmatpush1.msra.mxu0 0.0
    %572 = vmatprep.subr.mxu0 0.0
    %573 = vmatpush1.msra.mxu0 0.0
    %574 = vmatprep.subr.mxu0 0.0
    %575 = vmatpush1.msra.mxu0 0.0
    %576 = vmatprep.subr.mxu0 0.0
    %577 = vmatpush1.msra.mxu0 0.0
    %578 = vmatprep.subr.mxu0 0.0
    %579 = vmatpush1.msra.mxu0 0.0
    %580 = vmatprep.subr.mxu0 0.0
    %581 = vmatpush1.msra.mxu0 0.0
    %582 = vmatprep.subr.mxu0 0.0
    %583 = vmatpush1.msra.mxu0 0.0
    %584 = vmatprep.subr.mxu0 0.0
    %585 = vmatpush1.msra.mxu0 0.0
    %586 = vmatprep.subr.mxu0 0.0
    %587 = vmatpush1.msra.mxu0 0.0
    %588 = vmatprep.subr.mxu0 0.0
    %589 = vmatpush1.msra.mxu0 0.0
    %590 = vmatprep.mubr.f32.mxu0 0.0
    %591 = vmatmul.mubr.f32.gmra.mrb[0].mxu0 %v524
    %v592 = vpop.f32.mrb[0].mxu0
    %v593 = vadd.f32 0.0, %v592
    %v594 = vpop.f32.mrb[0].mxu0
    %595 = vdwg.mxu0
    %v596 = vld [vmem:[#allocation17] sm:$0xff]
    %v597 = vld [vmem:[#allocation17 + $0x8] sm:$0xff]
    %v598 = vld [vmem:[#allocation17 + $0x10] sm:$0xff]
    %v599 = vld [vmem:[#allocation17 + $0x18] sm:$0xff]
    %v600 = vld [vmem:[#allocation17 + $0x20] sm:$0xff]
    %v601 = vld [vmem:[#allocation17 + $0x28] sm:$0xff]
    %v602 = vld [vmem:[#allocation17 + $0x30] sm:$0xff]
    %v603 = vld [vmem:[#allocation17 + $0x38] sm:$0xff]
    %v604 = vld [vmem:[#allocation17 + $0x40] sm:$0xff]
    %v605 = vld [vmem:[#allocation17 + $0x48] sm:$0xff]
    %v606 = vld [vmem:[#allocation17 + $0x50] sm:$0xff]
    %v607 = vld [vmem:[#allocation17 + $0x58] sm:$0xff]
    %v608 = vld [vmem:[#allocation17 + $0x60] sm:$0xff]
    %v609 = vld [vmem:[#allocation17 + $0x68] sm:$0xff]
    %v610 = vld [vmem:[#allocation17 + $0x70] sm:$0xff]
    %v611 = vld [vmem:[#allocation17 + $0x78] sm:$0xff]
    %v612 = vld [vmem:[%s10] sm:$0x1]
    %v614 = vlaneseq
    %v615 = vshrl.u32 %v614, 7
    %v616 = vsub.s32 0, %v615
    %v617 = vrot.slane %v612, %v616
    %619 = vmatprep.subr.mxu0 0.0
    %620 = vmatpush1.msra.mxu0 %v596
    %621 = vmatprep.subr.mxu0 0.0
    %622 = vmatpush1.msra.mxu0 %v597
    %623 = vmatprep.subr.mxu0 0.0
    %624 = vmatpush1.msra.mxu0 %v598
    %625 = vmatprep.subr.mxu0 0.0
    %626 = vmatpush1.msra.mxu0 %v599
    %627 = vmatprep.subr.mxu0 0.0
    %628 = vmatpush1.msra.mxu0 %v600
    %629 = vmatprep.subr.mxu0 0.0
    %630 = vmatpush1.msra.mxu0 %v601
    %631 = vmatprep.subr.mxu0 0.0
    %632 = vmatpush1.msra.mxu0 %v602
    %633 = vmatprep.subr.mxu0 0.0
    %634 = vmatpush1.msra.mxu0 %v603
    %635 = vmatprep.subr.mxu0 0.0
    %636 = vmatpush1.msra.mxu0 %v604
    %637 = vmatprep.subr.mxu0 0.0
    %638 = vmatpush1.msra.mxu0 %v605
    %639 = vmatprep.subr.mxu0 0.0
    %640 = vmatpush1.msra.mxu0 %v606
    %641 = vmatprep.subr.mxu0 0.0
    %642 = vmatpush1.msra.mxu0 %v607
    %643 = vmatprep.subr.mxu0 0.0
    %644 = vmatpush1.msra.mxu0 %v608
    %645 = vmatprep.subr.mxu0 0.0
    %646 = vmatpush1.msra.mxu0 %v609
    %647 = vmatprep.subr.mxu0 0.0
    %648 = vmatpush1.msra.mxu0 %v610
    %649 = vmatprep.subr.mxu0 0.0
    %650 = vmatpush1.msra.mxu0 %v611
    %651 = vmatprep.subr.mxu0 0.0
    %652 = vmatpush1.msra.mxu0 0.0
    %653 = vmatprep.subr.mxu0 0.0
    %654 = vmatpush1.msra.mxu0 0.0
    %655 = vmatprep.subr.mxu0 0.0
    %656 = vmatpush1.msra.mxu0 0.0
    %657 = vmatprep.subr.mxu0 0.0
    %658 = vmatpush1.msra.mxu0 0.0
    %659 = vmatprep.subr.mxu0 0.0
    %660 = vmatpush1.msra.mxu0 0.0
    %661 = vmatprep.subr.mxu0 0.0
    %662 = vmatpush1.msra.mxu0 0.0
    %663 = vmatprep.subr.mxu0 0.0
    %664 = vmatpush1.msra.mxu0 0.0
    %665 = vmatprep.subr.mxu0 0.0
    %666 = vmatpush1.msra.mxu0 0.0
    %667 = vmatprep.subr.mxu0 0.0
    %668 = vmatpush1.msra.mxu0 0.0
    %669 = vmatprep.subr.mxu0 0.0
    %670 = vmatpush1.msra.mxu0 0.0
    %671 = vmatprep.subr.mxu0 0.0
    %672 = vmatpush1.msra.mxu0 0.0
    %673 = vmatprep.subr.mxu0 0.0
    %674 = vmatpush1.msra.mxu0 0.0
    %675 = vmatprep.subr.mxu0 0.0
    %676 = vmatpush1.msra.mxu0 0.0
    %677 = vmatprep.subr.mxu0 0.0
    %678 = vmatpush1.msra.mxu0 0.0
    %679 = vmatprep.subr.mxu0 0.0
    %680 = vmatpush1.msra.mxu0 0.0
    %681 = vmatprep.subr.mxu0 0.0
    %682 = vmatpush1.msra.mxu0 0.0
    %683 = vmatprep.mubr.f32.mxu0 0.0
    %684 = vmatmul.mubr.f32.gmra.mrb[0].mxu0 %v593
    %v685 = vpop.f32.mrb[0].mxu0
    %v686 = vadd.f32 %v617, %v685
    %v687 = vpop.f32.mrb[0].mxu0
    %688 = vdwg.mxu0
    %s689 = sld [smem:[#allocation7]]
    %v690 = vmul.f32 %v686, %v686
    %691 = vadd.xlane.f32.xlu0 %v690
    %v692 = vpop.xlane.xlu0 %691
    %v693 = vadd.f32 %v692, 1e-12
    %v694 = vrsqrt.pop %v693
    %v695 = vstv %s689
    %v696 = vmul.f32 %v695, %v694
    %v697 = vmul.f32 %v686, %v696
    %s698 = smul.u32 4, 16
    %s699 = smul.u32 %s698, 4
    %s700 = sshll.u32 %s699, 4
    %701 = dma.done [#allocation6], %s700
    %v702 = vld [vmem:[#allocation13] sm:$0xff]
    %v703 = vpack.c.bf16 %v702, %v702
    %v704 = vld [vmem:[#allocation2] sm:$0xff]
    %v705 = vld [vmem:[#allocation2 + $0x8] sm:$0xff]
    %v706 = vld [vmem:[#allocation2 + $0x10] sm:$0xff]
    %v707 = vld [vmem:[#allocation2 + $0x18] sm:$0xff]
    %v708 = vld [vmem:[#allocation2 + $0x20] sm:$0xff]
    %v709 = vld [vmem:[#allocation2 + $0x28] sm:$0xff]
    %v710 = vld [vmem:[#allocation2 + $0x30] sm:$0xff]
    %v711 = vld [vmem:[#allocation2 + $0x38] sm:$0xff]
    %v712 = vld [vmem:[#allocation2 + $0x40] sm:$0xff]
    %v713 = vld [vmem:[#allocation2 + $0x48] sm:$0xff]
    %v714 = vld [vmem:[#allocation2 + $0x50] sm:$0xff]
    %v715 = vld [vmem:[#allocation2 + $0x58] sm:$0xff]
    %v716 = vld [vmem:[#allocation2 + $0x60] sm:$0xff]
    %v717 = vld [vmem:[#allocation2 + $0x68] sm:$0xff]
    %v718 = vld [vmem:[#allocation2 + $0x70] sm:$0xff]
    %v719 = vld [vmem:[#allocation2 + $0x78] sm:$0xff]
    %v720 = vld [vmem:[#allocation2 + $0x80] sm:$0xff]
    %v721 = vld [vmem:[#allocation2 + $0x88] sm:$0xff]
    %v722 = vld [vmem:[#allocation2 + $0x90] sm:$0xff]
    %v723 = vld [vmem:[#allocation2 + $0x98] sm:$0xff]
    %v724 = vld [vmem:[#allocation2 + $0xa0] sm:$0xff]
    %v725 = vld [vmem:[#allocation2 + $0xa8] sm:$0xff]
    %v726 = vld [vmem:[#allocation2 + $0xb0] sm:$0xff]
    %v727 = vld [vmem:[#allocation2 + $0xb8] sm:$0xff]
    %v728 = vld [vmem:[#allocation2 + $0xc0] sm:$0xff]
    %v729 = vld [vmem:[#allocation2 + $0xc8] sm:$0xff]
    %v730 = vld [vmem:[#allocation2 + $0xd0] sm:$0xff]
    %v731 = vld [vmem:[#allocation2 + $0xd8] sm:$0xff]
    %v732 = vld [vmem:[#allocation2 + $0xe0] sm:$0xff]
    %v733 = vld [vmem:[#allocation2 + $0xe8] sm:$0xff]
    %v734 = vld [vmem:[#allocation2 + $0xf0] sm:$0xff]
    %v735 = vld [vmem:[#allocation2 + $0xf8] sm:$0xff]
    %v736 = vld [vmem:[%s11] sm:$0xf]
    %v738 = vlaneseq
    %v739 = vshrl.u32 %v738, 7
    %v740 = vsub.s32 0, %v739
    %v741 = vrot.slane %v736, %v740
    %v742 = vlaneseq
    %v743 = vshrl.u32 %v742, 7
    %v744 = vsub.s32 1, %v743
    %v745 = vrot.slane %v736, %v744
    %v746 = vlaneseq
    %v747 = vshrl.u32 %v746, 7
    %v748 = vsub.s32 2, %v747
    %v749 = vrot.slane %v736, %v748
    %v750 = vlaneseq
    %v751 = vshrl.u32 %v750, 7
    %v752 = vsub.s32 3, %v751
    %v753 = vrot.slane %v736, %v752
    %758 = vmatprep.subr.bf16.mxu0 %v705
    %759 = vmatpush1.bf16.msra.mxu0 %v704
    %760 = vmatprep.subr.bf16.mxu0 %v709
    %761 = vmatpush1.bf16.msra.mxu0 %v708
    %762 = vmatprep.subr.bf16.mxu0 %v713
    %763 = vmatpush1.bf16.msra.mxu0 %v712
    %764 = vmatprep.subr.bf16.mxu0 %v717
    %765 = vmatpush1.bf16.msra.mxu0 %v716
    %766 = vmatprep.subr.bf16.mxu0 %v721
    %767 = vmatpush1.bf16.msra.mxu0 %v720
    %768 = vmatprep.subr.bf16.mxu0 %v725
    %769 = vmatpush1.bf16.msra.mxu0 %v724
    %770 = vmatprep.subr.bf16.mxu0 %v729
    %771 = vmatpush1.bf16.msra.mxu0 %v728
    %772 = vmatprep.subr.bf16.mxu0 %v733
    %773 = vmatpush1.bf16.msra.mxu0 %v732
    %774 = vmatprep.subr.bf16.mxu0 0
    %775 = vmatpush1.bf16.msra.mxu0 0
    %776 = vmatprep.subr.bf16.mxu0 0
    %777 = vmatpush1.bf16.msra.mxu0 0
    %778 = vmatprep.subr.bf16.mxu0 0
    %779 = vmatpush1.bf16.msra.mxu0 0
    %780 = vmatprep.subr.bf16.mxu0 0
    %781 = vmatpush1.bf16.msra.mxu0 0
    %782 = vmatprep.subr.bf16.mxu0 0
    %783 = vmatpush1.bf16.msra.mxu0 0
    %784 = vmatprep.subr.bf16.mxu0 0
    %785 = vmatpush1.bf16.msra.mxu0 0
    %786 = vmatprep.subr.bf16.mxu0 0
    %787 = vmatpush1.bf16.msra.mxu0 0
    %788 = vmatprep.subr.bf16.mxu0 0
    %789 = vmatpush1.bf16.msra.mxu0 0
    %790 = vmatprep.mubr.bf16.mxu0 0
    %791 = vmatmul.mubr.bf16.gmra.mrb[0].mxu0 %v703
    %v792 = vpop.f32.mrb[0].mxu0
    %v793 = vadd.f32 %v741, %v792
    %v794 = vpop.f32.mrb[0].mxu0
    %v795 = vadd.f32 %v745, %v794
    %v796 = vpop.f32.mrb[0].mxu0
    %v797 = vpop.f32.mrb[0].mxu0
    %798 = vdwg.mxu0
    %799 = vmatprep.subr.bf16.mxu0 %v707
    %800 = vmatpush1.bf16.msra.mxu0 %v706
    %801 = vmatprep.subr.bf16.mxu0 %v711
    %802 = vmatpush1.bf16.msra.mxu0 %v710
    %803 = vmatprep.subr.bf16.mxu0 %v715
    %804 = vmatpush1.bf16.msra.mxu0 %v714
    %805 = vmatprep.subr.bf16.mxu0 %v719
    %806 = vmatpush1.bf16.msra.mxu0 %v718
    %807 = vmatprep.subr.bf16.mxu0 %v723
    %808 = vmatpush1.bf16.msra.mxu0 %v722
    %809 = vmatprep.subr.bf16.mxu0 %v727
    %810 = vmatpush1.bf16.msra.mxu0 %v726
    %811 = vmatprep.subr.bf16.mxu0 %v731
    %812 = vmatpush1.bf16.msra.mxu0 %v730
    %813 = vmatprep.subr.bf16.mxu0 %v735
    %814 = vmatpush1.bf16.msra.mxu0 %v734
    %815 = vmatprep.subr.bf16.mxu0 0
    %816 = vmatpush1.bf16.msra.mxu0 0
    %817 = vmatprep.subr.bf16.mxu0 0
    %818 = vmatpush1.bf16.msra.mxu0 0
    %819 = vmatprep.subr.bf16.mxu0 0
    %820 = vmatpush1.bf16.msra.mxu0 0
    %821 = vmatprep.subr.bf16.mxu0 0
    %822 = vmatpush1.bf16.msra.mxu0 0
    %823 = vmatprep.subr.bf16.mxu0 0
    %824 = vmatpush1.bf16.msra.mxu0 0
    %825 = vmatprep.subr.bf16.mxu0 0
    %826 = vmatpush1.bf16.msra.mxu0 0
    %827 = vmatprep.subr.bf16.mxu0 0
    %828 = vmatpush1.bf16.msra.mxu0 0
    %829 = vmatprep.subr.bf16.mxu0 0
    %830 = vmatpush1.bf16.msra.mxu0 0
    %831 = vmatprep.mubr.bf16.mxu0 0
    %832 = vmatmul.mubr.bf16.gmra.mrb[0].mxu0 %v703
    %v833 = vpop.f32.mrb[0].mxu0
    %v834 = vadd.f32 %v749, %v833
    %v835 = vpop.f32.mrb[0].mxu0
    %v836 = vadd.f32 %v753, %v835
    %v837 = vpop.f32.mrb[0].mxu0
    %v838 = vpop.f32.mrb[0].mxu0
    %839 = vdwg.mxu0
    %v840 = vmax.f32 %v793, 0.0
    %v841 = vmax.f32 %v795, 0.0
    %v842 = vmax.f32 %v834, 0.0
    %v843 = vmax.f32 %v836, 0.0
    %s844 = smul.u32 4, 64
    %s845 = smul.u32 %s844, 4
    %s846 = sshll.u32 %s845, 4
    %847 = dma.done %s168, %s846
    %v848 = vpack.c.bf16 %v840, %v840
    %v849 = vpack.c.bf16 %v841, %v841
    %v850 = vpack.c.bf16 %v842, %v842
    %v851 = vpack.c.bf16 %v843, %v843
    %v852 = vld [vmem:[#allocation3] sm:$0xff]
    %v853 = vld [vmem:[#allocation3 + $0x8] sm:$0xff]
    %v854 = vld [vmem:[#allocation3 + $0x10] sm:$0xff]
    %v855 = vld [vmem:[#allocation3 + $0x18] sm:$0xff]
    %v856 = vld [vmem:[#allocation3 + $0x20] sm:$0xff]
    %v857 = vld [vmem:[#allocation3 + $0x28] sm:$0xff]
    %v858 = vld [vmem:[#allocation3 + $0x30] sm:$0xff]
    %v859 = vld [vmem:[#allocation3 + $0x38] sm:$0xff]
    %v860 = vld [vmem:[#allocation3 + $0x40] sm:$0xff]
    %v861 = vld [vmem:[#allocation3 + $0x48] sm:$0xff]
    %v862 = vld [vmem:[#allocation3 + $0x50] sm:$0xff]
    %v863 = vld [vmem:[#allocation3 + $0x58] sm:$0xff]
    %v864 = vld [vmem:[#allocation3 + $0x60] sm:$0xff]
    %v865 = vld [vmem:[#allocation3 + $0x68] sm:$0xff]
    %v866 = vld [vmem:[#allocation3 + $0x70] sm:$0xff]
    %v867 = vld [vmem:[#allocation3 + $0x78] sm:$0xff]
    %v868 = vld [vmem:[#allocation3 + $0x80] sm:$0xff]
    %v869 = vld [vmem:[#allocation3 + $0x88] sm:$0xff]
    %v870 = vld [vmem:[#allocation3 + $0x90] sm:$0xff]
    %v871 = vld [vmem:[#allocation3 + $0x98] sm:$0xff]
    %v872 = vld [vmem:[#allocation3 + $0xa0] sm:$0xff]
    %v873 = vld [vmem:[#allocation3 + $0xa8] sm:$0xff]
    %v874 = vld [vmem:[#allocation3 + $0xb0] sm:$0xff]
    %v875 = vld [vmem:[#allocation3 + $0xb8] sm:$0xff]
    %v876 = vld [vmem:[#allocation3 + $0xc0] sm:$0xff]
    %v877 = vld [vmem:[#allocation3 + $0xc8] sm:$0xff]
    %v878 = vld [vmem:[#allocation3 + $0xd0] sm:$0xff]
    %v879 = vld [vmem:[#allocation3 + $0xd8] sm:$0xff]
    %v880 = vld [vmem:[#allocation3 + $0xe0] sm:$0xff]
    %v881 = vld [vmem:[#allocation3 + $0xe8] sm:$0xff]
    %v882 = vld [vmem:[#allocation3 + $0xf0] sm:$0xff]
    %v883 = vld [vmem:[#allocation3 + $0xf8] sm:$0xff]
    %v884 = vld [vmem:[#allocation3 + $0x100] sm:$0xff]
    %v885 = vld [vmem:[#allocation3 + $0x108] sm:$0xff]
    %v886 = vld [vmem:[#allocation3 + $0x110] sm:$0xff]
    %v887 = vld [vmem:[#allocation3 + $0x118] sm:$0xff]
    %v888 = vld [vmem:[#allocation3 + $0x120] sm:$0xff]
    %v889 = vld [vmem:[#allocation3 + $0x128] sm:$0xff]
    %v890 = vld [vmem:[#allocation3 + $0x130] sm:$0xff]
    %v891 = vld [vmem:[#allocation3 + $0x138] sm:$0xff]
    %v892 = vld [vmem:[#allocation3 + $0x140] sm:$0xff]
    %v893 = vld [vmem:[#allocation3 + $0x148] sm:$0xff]
    %v894 = vld [vmem:[#allocation3 + $0x150] sm:$0xff]
    %v895 = vld [vmem:[#allocation3 + $0x158] sm:$0xff]
    %v896 = vld [vmem:[#allocation3 + $0x160] sm:$0xff]
    %v897 = vld [vmem:[#allocation3 + $0x168] sm:$0xff]
    %v898 = vld [vmem:[#allocation3 + $0x170] sm:$0xff]
    %v899 = vld [vmem:[#allocation3 + $0x178] sm:$0xff]
    %v900 = vld [vmem:[#allocation3 + $0x180] sm:$0xff]
    %v901 = vld [vmem:[#allocation3 + $0x188] sm:$0xff]
    %v902 = vld [vmem:[#allocation3 + $0x190] sm:$0xff]
    %v903 = vld [vmem:[#allocation3 + $0x198] sm:$0xff]
    %v904 = vld [vmem:[#allocation3 + $0x1a0] sm:$0xff]
    %v905 = vld [vmem:[#allocation3 + $0x1a8] sm:$0xff]
    %v906 = vld [vmem:[#allocation3 + $0x1b0] sm:$0xff]
    %v907 = vld [vmem:[#allocation3 + $0x1b8] sm:$0xff]
    %v908 = vld [vmem:[#allocation3 + $0x1c0] sm:$0xff]
    %v909 = vld [vmem:[#allocation3 + $0x1c8] sm:$0xff]
    %v910 = vld [vmem:[#allocation3 + $0x1d0] sm:$0xff]
    %v911 = vld [vmem:[#allocation3 + $0x1d8] sm:$0xff]
    %v912 = vld [vmem:[#allocation3 + $0x1e0] sm:$0xff]
    %v913 = vld [vmem:[#allocation3 + $0x1e8] sm:$0xff]
    %v914 = vld [vmem:[#allocation3 + $0x1f0] sm:$0xff]
    %v915 = vld [vmem:[#allocation3 + $0x1f8] sm:$0xff]
    %v916 = vld [vmem:[#allocation3 + $0x200] sm:$0xff]
    %v917 = vld [vmem:[#allocation3 + $0x208] sm:$0xff]
    %v918 = vld [vmem:[#allocation3 + $0x210] sm:$0xff]
    %v919 = vld [vmem:[#allocation3 + $0x218] sm:$0xff]
    %v920 = vld [vmem:[#allocation3 + $0x220] sm:$0xff]
    %v921 = vld [vmem:[#allocation3 + $0x228] sm:$0xff]
    %v922 = vld [vmem:[#allocation3 + $0x230] sm:$0xff]
    %v923 = vld [vmem:[#allocation3 + $0x238] sm:$0xff]
    %v924 = vld [vmem:[#allocation3 + $0x240] sm:$0xff]
    %v925 = vld [vmem:[#allocation3 + $0x248] sm:$0xff]
    %v926 = vld [vmem:[#allocation3 + $0x250] sm:$0xff]
    %v927 = vld [vmem:[#allocation3 + $0x258] sm:$0xff]
    %v928 = vld [vmem:[#allocation3 + $0x260] sm:$0xff]
    %v929 = vld [vmem:[#allocation3 + $0x268] sm:$0xff]
    %v930 = vld [vmem:[#allocation3 + $0x270] sm:$0xff]
    %v931 = vld [vmem:[#allocation3 + $0x278] sm:$0xff]
    %v932 = vld [vmem:[#allocation3 + $0x280] sm:$0xff]
    %v933 = vld [vmem:[#allocation3 + $0x288] sm:$0xff]
    %v934 = vld [vmem:[#allocation3 + $0x290] sm:$0xff]
    %v935 = vld [vmem:[#allocation3 + $0x298] sm:$0xff]
    %v936 = vld [vmem:[#allocation3 + $0x2a0] sm:$0xff]
    %v937 = vld [vmem:[#allocation3 + $0x2a8] sm:$0xff]
    %v938 = vld [vmem:[#allocation3 + $0x2b0] sm:$0xff]
    %v939 = vld [vmem:[#allocation3 + $0x2b8] sm:$0xff]
    %v940 = vld [vmem:[#allocation3 + $0x2c0] sm:$0xff]
    %v941 = vld [vmem:[#allocation3 + $0x2c8] sm:$0xff]
    %v942 = vld [vmem:[#allocation3 + $0x2d0] sm:$0xff]
    %v943 = vld [vmem:[#allocation3 + $0x2d8] sm:$0xff]
    %v944 = vld [vmem:[#allocation3 + $0x2e0] sm:$0xff]
    %v945 = vld [vmem:[#allocation3 + $0x2e8] sm:$0xff]
    %v946 = vld [vmem:[#allocation3 + $0x2f0] sm:$0xff]
    %v947 = vld [vmem:[#allocation3 + $0x2f8] sm:$0xff]
    %v948 = vld [vmem:[#allocation3 + $0x300] sm:$0xff]
    %v949 = vld [vmem:[#allocation3 + $0x308] sm:$0xff]
    %v950 = vld [vmem:[#allocation3 + $0x310] sm:$0xff]
    %v951 = vld [vmem:[#allocation3 + $0x318] sm:$0xff]
    %v952 = vld [vmem:[#allocation3 + $0x320] sm:$0xff]
    %v953 = vld [vmem:[#allocation3 + $0x328] sm:$0xff]
    %v954 = vld [vmem:[#allocation3 + $0x330] sm:$0xff]
    %v955 = vld [vmem:[#allocation3 + $0x338] sm:$0xff]
    %v956 = vld [vmem:[#allocation3 + $0x340] sm:$0xff]
    %v957 = vld [vmem:[#allocation3 + $0x348] sm:$0xff]
    %v958 = vld [vmem:[#allocation3 + $0x350] sm:$0xff]
    %v959 = vld [vmem:[#allocation3 + $0x358] sm:$0xff]
    %v960 = vld [vmem:[#allocation3 + $0x360] sm:$0xff]
    %v961 = vld [vmem:[#allocation3 + $0x368] sm:$0xff]
    %v962 = vld [vmem:[#allocation3 + $0x370] sm:$0xff]
    %v963 = vld [vmem:[#allocation3 + $0x378] sm:$0xff]
    %v964 = vld [vmem:[#allocation3 + $0x380] sm:$0xff]
    %v965 = vld [vmem:[#allocation3 + $0x388] sm:$0xff]
    %v966 = vld [vmem:[#allocation3 + $0x390] sm:$0xff]
    %v967 = vld [vmem:[#allocation3 + $0x398] sm:$0xff]
    %v968 = vld [vmem:[#allocation3 + $0x3a0] sm:$0xff]
    %v969 = vld [vmem:[#allocation3 + $0x3a8] sm:$0xff]
    %v970 = vld [vmem:[#allocation3 + $0x3b0] sm:$0xff]
    %v971 = vld [vmem:[#allocation3 + $0x3b8] sm:$0xff]
    %v972 = vld [vmem:[#allocation3 + $0x3c0] sm:$0xff]
    %v973 = vld [vmem:[#allocation3 + $0x3c8] sm:$0xff]
    %v974 = vld [vmem:[#allocation3 + $0x3d0] sm:$0xff]
    %v975 = vld [vmem:[#allocation3 + $0x3d8] sm:$0xff]
    %v976 = vld [vmem:[#allocation3 + $0x3e0] sm:$0xff]
    %v977 = vld [vmem:[#allocation3 + $0x3e8] sm:$0xff]
    %v978 = vld [vmem:[#allocation3 + $0x3f0] sm:$0xff]
    %v979 = vld [vmem:[#allocation3 + $0x3f8] sm:$0xff]
    %v980 = vld [vmem:[%s12] sm:$0xf]
    %v982 = vlaneseq
    %v983 = vshrl.u32 %v982, 7
    %v984 = vsub.s32 0, %v983
    %v985 = vrot.slane %v980, %v984
    %v986 = vlaneseq
    %v987 = vshrl.u32 %v986, 7
    %v988 = vsub.s32 1, %v987
    %v989 = vrot.slane %v980, %v988
    %v990 = vlaneseq
    %v991 = vshrl.u32 %v990, 7
    %v992 = vsub.s32 2, %v991
    %v993 = vrot.slane %v980, %v992
    %v994 = vlaneseq
    %v995 = vshrl.u32 %v994, 7
    %v996 = vsub.s32 3, %v995
    %v997 = vrot.slane %v980, %v996
    %1002 = vmatprep.subr.bf16.mxu0 %v853
    %1003 = vmatpush1.bf16.msra.mxu0 %v852
    %1004 = vmatprep.subr.bf16.mxu0 %v857
    %1005 = vmatpush1.bf16.msra.mxu0 %v856
    %1006 = vmatprep.subr.bf16.mxu0 %v861
    %1007 = vmatpush1.bf16.msra.mxu0 %v860
    %1008 = vmatprep.subr.bf16.mxu0 %v865
    %1009 = vmatpush1.bf16.msra.mxu0 %v864
    %1010 = vmatprep.subr.bf16.mxu0 %v869
    %1011 = vmatpush1.bf16.msra.mxu0 %v868
    %1012 = vmatprep.subr.bf16.mxu0 %v873
    %1013 = vmatpush1.bf16.msra.mxu0 %v872
    %1014 = vmatprep.subr.bf16.mxu0 %v877
    %1015 = vmatpush1.bf16.msra.mxu0 %v876
    %1016 = vmatprep.subr.bf16.mxu0 %v881
    %1017 = vmatpush1.bf16.msra.mxu0 %v880
    %1018 = vmatprep.subr.bf16.mxu0 %v885
    %1019 = vmatpush1.bf16.msra.mxu0 %v884
    %1020 = vmatprep.subr.bf16.mxu0 %v889
    %1021 = vmatpush1.bf16.msra.mxu0 %v888
    %1022 = vmatprep.subr.bf16.mxu0 %v893
    %1023 = vmatpush1.bf16.msra.mxu0 %v892
    %1024 = vmatprep.subr.bf16.mxu0 %v897
    %1025 = vmatpush1.bf16.msra.mxu0 %v896
    %1026 = vmatprep.subr.bf16.mxu0 %v901
    %1027 = vmatpush1.bf16.msra.mxu0 %v900
    %1028 = vmatprep.subr.bf16.mxu0 %v905
    %1029 = vmatpush1.bf16.msra.mxu0 %v904
    %1030 = vmatprep.subr.bf16.mxu0 %v909
    %1031 = vmatpush1.bf16.msra.mxu0 %v908
    %1032 = vmatprep.subr.bf16.mxu0 %v913
    %1033 = vmatpush1.bf16.msra.mxu0 %v912
    %1034 = vmatprep.mubr.bf16.mxu0 %v849
    %1035 = vmatmul.mubr.bf16.gmra.mrb[0].mxu0 %v848
    %v1036 = vpop.f32.mrb[0].mxu0
    %v1037 = vadd.f32 %v985, %v1036
    %v1038 = vpop.f32.mrb[0].mxu0
    %v1039 = vadd.f32 %v989, %v1038
    %v1040 = vpop.f32.mrb[0].mxu0
    %v1041 = vpop.f32.mrb[0].mxu0
    %1042 = vdwg.mxu0
    %1043 = vmatprep.subr.bf16.mxu0 %v917
    %1044 = vmatpush1.bf16.msra.mxu0 %v916
    %1045 = vmatprep.subr.bf16.mxu0 %v921
    %1046 = vmatpush1.bf16.msra.mxu0 %v920
    %1047 = vmatprep.subr.bf16.mxu0 %v925
    %1048 = vmatpush1.bf16.msra.mxu0 %v924
    %1049 = vmatprep.subr.bf16.mxu0 %v929
    %1050 = vmatpush1.bf16.msra.mxu0 %v928
    %1051 = vmatprep.subr.bf16.mxu0 %v933
    %1052 = vmatpush1.bf16.msra.mxu0 %v932
    %1053 = vmatprep.subr.bf16.mxu0 %v937
    %1054 = vmatpush1.bf16.msra.mxu0 %v936
    %1055 = vmatprep.subr.bf16.mxu0 %v941
    %1056 = vmatpush1.bf16.msra.mxu0 %v940
    %1057 = vmatprep.subr.bf16.mxu0 %v945
    %1058 = vmatpush1.bf16.msra.mxu0 %v944
    %1059 = vmatprep.subr.bf16.mxu0 %v949
    %1060 = vmatpush1.bf16.msra.mxu0 %v948
    %1061 = vmatprep.subr.bf16.mxu0 %v953
    %1062 = vmatpush1.bf16.msra.mxu0 %v952
    %1063 = vmatprep.subr.bf16.mxu0 %v957
    %1064 = vmatpush1.bf16.msra.mxu0 %v956
    %1065 = vmatprep.subr.bf16.mxu0 %v961
    %1066 = vmatpush1.bf16.msra.mxu0 %v960
    %1067 = vmatprep.subr.bf16.mxu0 %v965
    %1068 = vmatpush1.bf16.msra.mxu0 %v964
    %1069 = vmatprep.subr.bf16.mxu0 %v969
    %1070 = vmatpush1.bf16.msra.mxu0 %v968
    %1071 = vmatprep.subr.bf16.mxu0 %v973
    %1072 = vmatpush1.bf16.msra.mxu0 %v972
    %1073 = vmatprep.subr.bf16.mxu0 %v977
    %1074 = vmatpush1.bf16.msra.mxu0 %v976
    %1075 = vmatprep.mubr.bf16.mxu0 %v851
    %1076 = vmatmul.mubr.bf16.gmra.mrb[0].mxu0 %v850
    %v1077 = vpop.f32.mrb[0].mxu0
    %v1078 = vadd.f32 %v1037, %v1077
    %v1079 = vpop.f32.mrb[0].mxu0
    %v1080 = vadd.f32 %v1039, %v1079
    %v1081 = vpop.f32.mrb[0].mxu0
    %v1082 = vpop.f32.mrb[0].mxu0
    %1083 = vdwg.mxu0
    %1084 = vmatprep.subr.bf16.mxu0 %v855
    %1085 = vmatpush1.bf16.msra.mxu0 %v854
    %1086 = vmatprep.subr.bf16.mxu0 %v859
    %1087 = vmatpush1.bf16.msra.mxu0 %v858
    %1088 = vmatprep.subr.bf16.mxu0 %v863
    %1089 = vmatpush1.bf16.msra.mxu0 %v862
    %1090 = vmatprep.subr.bf16.mxu0 %v867
    %1091 = vmatpush1.bf16.msra.mxu0 %v866
    %1092 = vmatprep.subr.bf16.mxu0 %v871
    %1093 = vmatpush1.bf16.msra.mxu0 %v870
    %1094 = vmatprep.subr.bf16.mxu0 %v875
    %1095 = vmatpush1.bf16.msra.mxu0 %v874
    %1096 = vmatprep.subr.bf16.mxu0 %v879
    %1097 = vmatpush1.bf16.msra.mxu0 %v878
    %1098 = vmatprep.subr.bf16.mxu0 %v883
    %1099 = vmatpush1.bf16.msra.mxu0 %v882
    %1100 = vmatprep.subr.bf16.mxu0 %v887
    %1101 = vmatpush1.bf16.msra.mxu0 %v886
    %1102 = vmatprep.subr.bf16.mxu0 %v891
    %1103 = vmatpush1.bf16.msra.mxu0 %v890
    %1104 = vmatprep.subr.bf16.mxu0 %v895
    %1105 = vmatpush1.bf16.msra.mxu0 %v894
    %1106 = vmatprep.subr.bf16.mxu0 %v899
    %1107 = vmatpush1.bf16.msra.mxu0 %v898
    %1108 = vmatprep.subr.bf16.mxu0 %v903
    %1109 = vmatpush1.bf16.msra.mxu0 %v902
    %1110 = vmatprep.subr.bf16.mxu0 %v907
    %1111 = vmatpush1.bf16.msra.mxu0 %v906
    %1112 = vmatprep.subr.bf16.mxu0 %v911
    %1113 = vmatpush1.bf16.msra.mxu0 %v910
    %1114 = vmatprep.subr.bf16.mxu0 %v915
    %1115 = vmatpush1.bf16.msra.mxu0 %v914
    %1116 = vmatprep.mubr.bf16.mxu0 %v849
    %1117 = vmatmul.mubr.bf16.gmra.mrb[0].mxu0 %v848
    %v1118 = vpop.f32.mrb[0].mxu0
    %v1119 = vadd.f32 %v993, %v1118
    %v1120 = vpop.f32.mrb[0].mxu0
    %v1121 = vadd.f32 %v997, %v1120
    %v1122 = vpop.f32.mrb[0].mxu0
    %v1123 = vpop.f32.mrb[0].mxu0
    %1124 = vdwg.mxu0
    %1125 = vmatprep.subr.bf16.mxu0 %v919
    %1126 = vmatpush1.bf16.msra.mxu0 %v918
    %1127 = vmatprep.subr.bf16.mxu0 %v923
    %1128 = vmatpush1.bf16.msra.mxu0 %v922
    %1129 = vmatprep.subr.bf16.mxu0 %v927
    %1130 = vmatpush1.bf16.msra.mxu0 %v926
    %1131 = vmatprep.subr.bf16.mxu0 %v931
    %1132 = vmatpush1.bf16.msra.mxu0 %v930
    %1133 = vmatprep.subr.bf16.mxu0 %v935
    %1134 = vmatpush1.bf16.msra.mxu0 %v934
    %1135 = vmatprep.subr.bf16.mxu0 %v939
    %1136 = vmatpush1.bf16.msra.mxu0 %v938
    %1137 = vmatprep.subr.bf16.mxu0 %v943
    %1138 = vmatpush1.bf16.msra.mxu0 %v942
    %1139 = vmatprep.subr.bf16.mxu0 %v947
    %1140 = vmatpush1.bf16.msra.mxu0 %v946
    %1141 = vmatprep.subr.bf16.mxu0 %v951
    %1142 = vmatpush1.bf16.msra.mxu0 %v950
    %1143 = vmatprep.subr.bf16.mxu0 %v955
    %1144 = vmatpush1.bf16.msra.mxu0 %v954
    %1145 = vmatprep.subr.bf16.mxu0 %v959
    %1146 = vmatpush1.bf16.msra.mxu0 %v958
    %1147 = vmatprep.subr.bf16.mxu0 %v963
    %1148 = vmatpush1.bf16.msra.mxu0 %v962
    %1149 = vmatprep.subr.bf16.mxu0 %v967
    %1150 = vmatpush1.bf16.msra.mxu0 %v966
    %1151 = vmatprep.subr.bf16.mxu0 %v971
    %1152 = vmatpush1.bf16.msra.mxu0 %v970
    %1153 = vmatprep.subr.bf16.mxu0 %v975
    %1154 = vmatpush1.bf16.msra.mxu0 %v974
    %1155 = vmatprep.subr.bf16.mxu0 %v979
    %1156 = vmatpush1.bf16.msra.mxu0 %v978
    %1157 = vmatprep.mubr.bf16.mxu0 %v851
    %1158 = vmatmul.mubr.bf16.gmra.mrb[0].mxu0 %v850
    %v1159 = vpop.f32.mrb[0].mxu0
    %v1160 = vadd.f32 %v1119, %v1159
    %v1161 = vpop.f32.mrb[0].mxu0
    %v1162 = vadd.f32 %v1121, %v1161
    %v1163 = vpop.f32.mrb[0].mxu0
    %v1164 = vpop.f32.mrb[0].mxu0
    %1165 = vdwg.mxu0
    %s1166 = smul.u32 %s844, 2
    %s1167 = sshll.u32 %s1166, 4
    %1168 = dma.done %s203, %s1167
    %v1169 = vpack.c.bf16 %v1078, %v1078
    %v1170 = vpack.c.bf16 %v1080, %v1080
    %v1171 = vpack.c.bf16 %v1160, %v1160
    %v1172 = vpack.c.bf16 %v1162, %v1162
    %v1173 = vld [vmem:[#allocation4] sm:$0xff]
    %v1174 = vld [vmem:[#allocation4 + $0x8] sm:$0xff]
    %v1175 = vld [vmem:[#allocation4 + $0x10] sm:$0xff]
    %v1176 = vld [vmem:[#allocation4 + $0x18] sm:$0xff]
    %v1177 = vld [vmem:[#allocation4 + $0x20] sm:$0xff]
    %v1178 = vld [vmem:[#allocation4 + $0x28] sm:$0xff]
    %v1179 = vld [vmem:[#allocation4 + $0x30] sm:$0xff]
    %v1180 = vld [vmem:[#allocation4 + $0x38] sm:$0xff]
    %v1181 = vld [vmem:[#allocation4 + $0x40] sm:$0xff]
    %v1182 = vld [vmem:[#allocation4 + $0x48] sm:$0xff]
    %v1183 = vld [vmem:[#allocation4 + $0x50] sm:$0xff]
    %v1184 = vld [vmem:[#allocation4 + $0x58] sm:$0xff]
    %v1185 = vld [vmem:[#allocation4 + $0x60] sm:$0xff]
    %v1186 = vld [vmem:[#allocation4 + $0x68] sm:$0xff]
    %v1187 = vld [vmem:[#allocation4 + $0x70] sm:$0xff]
    %v1188 = vld [vmem:[#allocation4 + $0x78] sm:$0xff]
    %v1189 = vld [vmem:[#allocation4 + $0x80] sm:$0xff]
    %v1190 = vld [vmem:[#allocation4 + $0x88] sm:$0xff]
    %v1191 = vld [vmem:[#allocation4 + $0x90] sm:$0xff]
    %v1192 = vld [vmem:[#allocation4 + $0x98] sm:$0xff]
    %v1193 = vld [vmem:[#allocation4 + $0xa0] sm:$0xff]
    %v1194 = vld [vmem:[#allocation4 + $0xa8] sm:$0xff]
    %v1195 = vld [vmem:[#allocation4 + $0xb0] sm:$0xff]
    %v1196 = vld [vmem:[#allocation4 + $0xb8] sm:$0xff]
    %v1197 = vld [vmem:[#allocation4 + $0xc0] sm:$0xff]
    %v1198 = vld [vmem:[#allocation4 + $0xc8] sm:$0xff]
    %v1199 = vld [vmem:[#allocation4 + $0xd0] sm:$0xff]
    %v1200 = vld [vmem:[#allocation4 + $0xd8] sm:$0xff]
    %v1201 = vld [vmem:[#allocation4 + $0xe0] sm:$0xff]
    %v1202 = vld [vmem:[#allocation4 + $0xe8] sm:$0xff]
    %v1203 = vld [vmem:[#allocation4 + $0xf0] sm:$0xff]
    %v1204 = vld [vmem:[#allocation4 + $0xf8] sm:$0xff]
    %v1205 = vld [vmem:[#allocation4 + $0x100] sm:$0xff]
    %v1206 = vld [vmem:[#allocation4 + $0x108] sm:$0xff]
    %v1207 = vld [vmem:[#allocation4 + $0x110] sm:$0xff]
    %v1208 = vld [vmem:[#allocation4 + $0x118] sm:$0xff]
    %v1209 = vld [vmem:[#allocation4 + $0x120] sm:$0xff]
    %v1210 = vld [vmem:[#allocation4 + $0x128] sm:$0xff]
    %v1211 = vld [vmem:[#allocation4 + $0x130] sm:$0xff]
    %v1212 = vld [vmem:[#allocation4 + $0x138] sm:$0xff]
    %v1213 = vld [vmem:[#allocation4 + $0x140] sm:$0xff]
    %v1214 = vld [vmem:[#allocation4 + $0x148] sm:$0xff]
    %v1215 = vld [vmem:[#allocation4 + $0x150] sm:$0xff]
    %v1216 = vld [vmem:[#allocation4 + $0x158] sm:$0xff]
    %v1217 = vld [vmem:[#allocation4 + $0x160] sm:$0xff]
    %v1218 = vld [vmem:[#allocation4 + $0x168] sm:$0xff]
    %v1219 = vld [vmem:[#allocation4 + $0x170] sm:$0xff]
    %v1220 = vld [vmem:[#allocation4 + $0x178] sm:$0xff]
    %v1221 = vld [vmem:[#allocation4 + $0x180] sm:$0xff]
    %v1222 = vld [vmem:[#allocation4 + $0x188] sm:$0xff]
    %v1223 = vld [vmem:[#allocation4 + $0x190] sm:$0xff]
    %v1224 = vld [vmem:[#allocation4 + $0x198] sm:$0xff]
    %v1225 = vld [vmem:[#allocation4 + $0x1a0] sm:$0xff]
    %v1226 = vld [vmem:[#allocation4 + $0x1a8] sm:$0xff]
    %v1227 = vld [vmem:[#allocation4 + $0x1b0] sm:$0xff]
    %v1228 = vld [vmem:[#allocation4 + $0x1b8] sm:$0xff]
    %v1229 = vld [vmem:[#allocation4 + $0x1c0] sm:$0xff]
    %v1230 = vld [vmem:[#allocation4 + $0x1c8] sm:$0xff]
    %v1231 = vld [vmem:[#allocation4 + $0x1d0] sm:$0xff]
    %v1232 = vld [vmem:[#allocation4 + $0x1d8] sm:$0xff]
    %v1233 = vld [vmem:[#allocation4 + $0x1e0] sm:$0xff]
    %v1234 = vld [vmem:[#allocation4 + $0x1e8] sm:$0xff]
    %v1235 = vld [vmem:[#allocation4 + $0x1f0] sm:$0xff]
    %v1236 = vld [vmem:[#allocation4 + $0x1f8] sm:$0xff]
    %v1237 = vld [vmem:[%s13] sm:$0x3]
    %v1239 = vlaneseq
    %v1240 = vshrl.u32 %v1239, 7
    %v1241 = vsub.s32 0, %v1240
    %v1242 = vrot.slane %v1237, %v1241
    %v1243 = vlaneseq
    %v1244 = vshrl.u32 %v1243, 7
    %v1245 = vsub.s32 1, %v1244
    %v1246 = vrot.slane %v1237, %v1245
    %1249 = vmatprep.subr.bf16.mxu0 %v1174
    %1250 = vmatpush1.bf16.msra.mxu0 %v1173
    %1251 = vmatprep.subr.bf16.mxu0 %v1176
    %1252 = vmatpush1.bf16.msra.mxu0 %v1175
    %1253 = vmatprep.subr.bf16.mxu0 %v1178
    %1254 = vmatpush1.bf16.msra.mxu0 %v1177
    %1255 = vmatprep.subr.bf16.mxu0 %v1180
    %1256 = vmatpush1.bf16.msra.mxu0 %v1179
    %1257 = vmatprep.subr.bf16.mxu0 %v1182
    %1258 = vmatpush1.bf16.msra.mxu0 %v1181
    %1259 = vmatprep.subr.bf16.mxu0 %v1184
    %1260 = vmatpush1.bf16.msra.mxu0 %v1183
    %1261 = vmatprep.subr.bf16.mxu0 %v1186
    %1262 = vmatpush1.bf16.msra.mxu0 %v1185
    %1263 = vmatprep.subr.bf16.mxu0 %v1188
    %1264 = vmatpush1.bf16.msra.mxu0 %v1187
    %1265 = vmatprep.subr.bf16.mxu0 %v1190
    %1266 = vmatpush1.bf16.msra.mxu0 %v1189
    %1267 = vmatprep.subr.bf16.mxu0 %v1192
    %1268 = vmatpush1.bf16.msra.mxu0 %v1191
    %1269 = vmatprep.subr.bf16.mxu0 %v1194
    %1270 = vmatpush1.bf16.msra.mxu0 %v1193
    %1271 = vmatprep.subr.bf16.mxu0 %v1196
    %1272 = vmatpush1.bf16.msra.mxu0 %v1195
    %1273 = vmatprep.subr.bf16.mxu0 %v1198
    %1274 = vmatpush1.bf16.msra.mxu0 %v1197
    %1275 = vmatprep.subr.bf16.mxu0 %v1200
    %1276 = vmatpush1.bf16.msra.mxu0 %v1199
    %1277 = vmatprep.subr.bf16.mxu0 %v1202
    %1278 = vmatpush1.bf16.msra.mxu0 %v1201
    %1279 = vmatprep.subr.bf16.mxu0 %v1204
    %1280 = vmatpush1.bf16.msra.mxu0 %v1203
    %1281 = vmatprep.mubr.bf16.mxu0 %v1170
    %1282 = vmatmul.mubr.bf16.gmra.mrb[0].mxu0 %v1169
    %v1283 = vpop.f32.mrb[0].mxu0
    %v1284 = vadd.f32 %v1242, %v1283
    %v1285 = vpop.f32.mrb[0].mxu0
    %v1286 = vadd.f32 %v1246, %v1285
    %v1287 = vpop.f32.mrb[0].mxu0
    %v1288 = vpop.f32.mrb[0].mxu0
    %1289 = vdwg.mxu0
    %1290 = vmatprep.subr.bf16.mxu0 %v1206
    %1291 = vmatpush1.bf16.msra.mxu0 %v1205
    %1292 = vmatprep.subr.bf16.mxu0 %v1208
    %1293 = vmatpush1.bf16.msra.mxu0 %v1207
    %1294 = vmatprep.subr.bf16.mxu0 %v1210
    %1295 = vmatpush1.bf16.msra.mxu0 %v1209
    %1296 = vmatprep.subr.bf16.mxu0 %v1212
    %1297 = vmatpush1.bf16.msra.mxu0 %v1211
    %1298 = vmatprep.subr.bf16.mxu0 %v1214
    %1299 = vmatpush1.bf16.msra.mxu0 %v1213
    %1300 = vmatprep.subr.bf16.mxu0 %v1216
    %1301 = vmatpush1.bf16.msra.mxu0 %v1215
    %1302 = vmatprep.subr.bf16.mxu0 %v1218
    %1303 = vmatpush1.bf16.msra.mxu0 %v1217
    %1304 = vmatprep.subr.bf16.mxu0 %v1220
    %1305 = vmatpush1.bf16.msra.mxu0 %v1219
    %1306 = vmatprep.subr.bf16.mxu0 %v1222
    %1307 = vmatpush1.bf16.msra.mxu0 %v1221
    %1308 = vmatprep.subr.bf16.mxu0 %v1224
    %1309 = vmatpush1.bf16.msra.mxu0 %v1223
    %1310 = vmatprep.subr.bf16.mxu0 %v1226
    %1311 = vmatpush1.bf16.msra.mxu0 %v1225
    %1312 = vmatprep.subr.bf16.mxu0 %v1228
    %1313 = vmatpush1.bf16.msra.mxu0 %v1227
    %1314 = vmatprep.subr.bf16.mxu0 %v1230
    %1315 = vmatpush1.bf16.msra.mxu0 %v1229
    %1316 = vmatprep.subr.bf16.mxu0 %v1232
    %1317 = vmatpush1.bf16.msra.mxu0 %v1231
    %1318 = vmatprep.subr.bf16.mxu0 %v1234
    %1319 = vmatpush1.bf16.msra.mxu0 %v1233
    %1320 = vmatprep.subr.bf16.mxu0 %v1236
    %1321 = vmatpush1.bf16.msra.mxu0 %v1235
    %1322 = vmatprep.mubr.bf16.mxu0 %v1172
    %1323 = vmatmul.mubr.bf16.gmra.mrb[0].mxu0 %v1171
    %v1324 = vpop.f32.mrb[0].mxu0
    %v1325 = vadd.f32 %v1284, %v1324
    %v1326 = vpop.f32.mrb[0].mxu0
    %v1327 = vadd.f32 %v1286, %v1326
    %v1328 = vpop.f32.mrb[0].mxu0
    %v1329 = vpop.f32.mrb[0].mxu0
    %1330 = vdwg.mxu0
    %v1331 = vmax.f32 %v1325, 0.0
    %v1332 = vmax.f32 %v1327, 0.0
    %s1333 = smul.u32 4, 32
    %s1334 = smul.u32 %s1333, 1
    %s1335 = sshll.u32 %s1334, 4
    %1336 = dma.done %s238, %s1335
    %v1337 = vpack.c.bf16 %v1331, %v1331
    %v1338 = vpack.c.bf16 %v1332, %v1332
    %v1339 = vld [vmem:[#allocation5] sm:$0xff]
    %v1340 = vld [vmem:[#allocation5 + $0x8] sm:$0xff]
    %v1341 = vld [vmem:[#allocation5 + $0x10] sm:$0xff]
    %v1342 = vld [vmem:[#allocation5 + $0x18] sm:$0xff]
    %v1343 = vld [vmem:[#allocation5 + $0x20] sm:$0xff]
    %v1344 = vld [vmem:[#allocation5 + $0x28] sm:$0xff]
    %v1345 = vld [vmem:[#allocation5 + $0x30] sm:$0xff]
    %v1346 = vld [vmem:[#allocation5 + $0x38] sm:$0xff]
    %v1347 = vld [vmem:[#allocation5 + $0x40] sm:$0xff]
    %v1348 = vld [vmem:[#allocation5 + $0x48] sm:$0xff]
    %v1349 = vld [vmem:[#allocation5 + $0x50] sm:$0xff]
    %v1350 = vld [vmem:[#allocation5 + $0x58] sm:$0xff]
    %v1351 = vld [vmem:[#allocation5 + $0x60] sm:$0xff]
    %v1352 = vld [vmem:[#allocation5 + $0x68] sm:$0xff]
    %v1353 = vld [vmem:[#allocation5 + $0x70] sm:$0xff]
    %v1354 = vld [vmem:[#allocation5 + $0x78] sm:$0xff]
    %v1355 = vld [vmem:[%s14] sm:$0x1]
    %v1357 = vlaneseq
    %v1358 = vshrl.u32 %v1357, 7
    %v1359 = vsub.s32 0, %v1358
    %v1360 = vrot.slane %v1355, %v1359
    %1362 = vmatprep.subr.bf16.mxu0 0
    %1363 = vmatpush1.bf16.msra.mxu0 %v1339
    %1364 = vmatprep.subr.bf16.mxu0 0
    %1365 = vmatpush1.bf16.msra.mxu0 %v1340
    %1366 = vmatprep.subr.bf16.mxu0 0
    %1367 = vmatpush1.bf16.msra.mxu0 %v1341
    %1368 = vmatprep.subr.bf16.mxu0 0
    %1369 = vmatpush1.bf16.msra.mxu0 %v1342
    %1370 = vmatprep.subr.bf16.mxu0 0
    %1371 = vmatpush1.bf16.msra.mxu0 %v1343
    %1372 = vmatprep.subr.bf16.mxu0 0
    %1373 = vmatpush1.bf16.msra.mxu0 %v1344
    %1374 = vmatprep.subr.bf16.mxu0 0
    %1375 = vmatpush1.bf16.msra.mxu0 %v1345
    %1376 = vmatprep.subr.bf16.mxu0 0
    %1377 = vmatpush1.bf16.msra.mxu0 %v1346
    %1378 = vmatprep.subr.bf16.mxu0 0
    %1379 = vmatpush1.bf16.msra.mxu0 %v1347
    %1380 = vmatprep.subr.bf16.mxu0 0
    %1381 = vmatpush1.bf16.msra.mxu0 %v1348
    %1382 = vmatprep.subr.bf16.mxu0 0
    %1383 = vmatpush1.bf16.msra.mxu0 %v1349
    %1384 = vmatprep.subr.bf16.mxu0 0
    %1385 = vmatpush1.bf16.msra.mxu0 %v1350
    %1386 = vmatprep.subr.bf16.mxu0 0
    %1387 = vmatpush1.bf16.msra.mxu0 %v1351
    %1388 = vmatprep.subr.bf16.mxu0 0
    %1389 = vmatpush1.bf16.msra.mxu0 %v1352
    %1390 = vmatprep.subr.bf16.mxu0 0
    %1391 = vmatpush1.bf16.msra.mxu0 %v1353
    %1392 = vmatprep.subr.bf16.mxu0 0
    %1393 = vmatpush1.bf16.msra.mxu0 %v1354
    %1394 = vmatprep.mubr.bf16.mxu0 %v1338
    %1395 = vmatmul.mubr.bf16.gmra.mrb[0].mxu0 %v1337
    %v1396 = vpop.f32.mrb[0].mxu0
    %v1397 = vadd.f32 %v1360, %v1396
    %v1398 = vpop.f32.mrb[0].mxu0
    %v1399 = vpop.f32.mrb[0].mxu0
    %v1400 = vpop.f32.mrb[0].mxu0
    %1401 = vdwg.mxu0
    %v1402 = vmul.f32 %v1397, %v1397
    %1403 = vadd.xlane.f32.xlu0 %v1402
    %v1404 = vpop.xlane.xlu0 %1403
    %v1405 = vadd.f32 %v1404, 1e-12
    %v1406 = vrsqrt.pop %v1405
    %v1407 = vmul.f32 %v1397, %v1406
    %1408 = vmatprep.subr.mxu0 0.0
    %1409 = vmatpush1.xpose.msra.mxu0 %v1407
    %1410 = vmatprep.subr.mxu0 0.0
    %1411 = vmatpush1.xpose.msra.mxu0 0.0
    %1412 = vmatprep.subr.mxu0 0.0
    %1413 = vmatpush1.xpose.msra.mxu0 0.0
    %1414 = vmatprep.subr.mxu0 0.0
    %1415 = vmatpush1.xpose.msra.mxu0 0.0
    %1416 = vmatprep.subr.mxu0 0.0
    %1417 = vmatpush1.xpose.msra.mxu0 0.0
    %1418 = vmatprep.subr.mxu0 0.0
    %1419 = vmatpush1.xpose.msra.mxu0 0.0
    %1420 = vmatprep.subr.mxu0 0.0
    %1421 = vmatpush1.xpose.msra.mxu0 0.0
    %1422 = vmatprep.subr.mxu0 0.0
    %1423 = vmatpush1.xpose.msra.mxu0 0.0
    %1424 = vmatprep.subr.mxu0 0.0
    %1425 = vmatpush1.xpose.msra.mxu0 0.0
    %1426 = vmatprep.subr.mxu0 0.0
    %1427 = vmatpush1.xpose.msra.mxu0 0.0
    %1428 = vmatprep.subr.mxu0 0.0
    %1429 = vmatpush1.xpose.msra.mxu0 0.0
    %1430 = vmatprep.subr.mxu0 0.0
    %1431 = vmatpush1.xpose.msra.mxu0 0.0
    %1432 = vmatprep.subr.mxu0 0.0
    %1433 = vmatpush1.xpose.msra.mxu0 0.0
    %1434 = vmatprep.subr.mxu0 0.0
    %1435 = vmatpush1.xpose.msra.mxu0 0.0
    %1436 = vmatprep.subr.mxu0 0.0
    %1437 = vmatpush1.xpose.msra.mxu0 0.0
    %1438 = vmatprep.subr.mxu0 0.0
    %1439 = vmatpush1.xpose.msra.mxu0 0.0
    %1440 = vmatprep.subr.mxu0 0.0
    %1441 = vmatpush1.xpose.msra.mxu0 0.0
    %1442 = vmatprep.subr.mxu0 0.0
    %1443 = vmatpush1.xpose.msra.mxu0 0.0
    %1444 = vmatprep.subr.mxu0 0.0
    %1445 = vmatpush1.xpose.msra.mxu0 0.0
    %1446 = vmatprep.subr.mxu0 0.0
    %1447 = vmatpush1.xpose.msra.mxu0 0.0
    %1448 = vmatprep.subr.mxu0 0.0
    %1449 = vmatpush1.xpose.msra.mxu0 0.0
    %1450 = vmatprep.subr.mxu0 0.0
    %1451 = vmatpush1.xpose.msra.mxu0 0.0
    %1452 = vmatprep.subr.mxu0 0.0
    %1453 = vmatpush1.xpose.msra.mxu0 0.0
    %1454 = vmatprep.subr.mxu0 0.0
    %1455 = vmatpush1.xpose.msra.mxu0 0.0
    %1456 = vmatprep.subr.mxu0 0.0
    %1457 = vmatpush1.xpose.msra.mxu0 0.0
    %1458 = vmatprep.subr.mxu0 0.0
    %1459 = vmatpush1.xpose.msra.mxu0 0.0
    %1460 = vmatprep.subr.mxu0 0.0
    %1461 = vmatpush1.xpose.msra.mxu0 0.0
    %1462 = vmatprep.subr.mxu0 0.0
    %1463 = vmatpush1.xpose.msra.mxu0 0.0
    %1464 = vmatprep.subr.mxu0 0.0
    %1465 = vmatpush1.xpose.msra.mxu0 0.0
    %1466 = vmatprep.subr.mxu0 0.0
    %1467 = vmatpush1.xpose.msra.mxu0 0.0
    %1468 = vmatprep.subr.mxu0 0.0
    %1469 = vmatpush1.xpose.msra.mxu0 0.0
    %1470 = vmatprep.subr.mxu0 0.0
    %1471 = vmatpush1.xpose.msra.mxu0 0.0
    %1472 = vmatprep.mubr.f32.mxu0 0.0
    %1473 = vmatmul.mubr.f32.gmra.mrb[0].mxu0 %v697
    %v1474 = vpop.f32.mrb[0].mxu0
    %v1475 = vadd.f32 0.0, %v1474
    %v1476 = vpop.f32.mrb[0].mxu0
    %1477 = vdwg.mxu0
    %1478 = vst.msk [vmem:[#allocation19] sm:$0xff] %vm511, %v1475
    // Predicated region
    $region90: #{tpu_custom_call.1} parent=1 // pred_check
      _
    $region91: #{tpu_custom_call.1} parent=1 // pred_check_branch
      %1480 = sbr.rel (0) target = $region93
    $region92: #{tpu_custom_call.1} parent=1 // pred_region
      %s1482 = ssub.s32 128, 128
      %1483 = vsyncadd [#allocation10], %s1482
      %s1485 = sshll.u32 [#allocation19], 4
      %s1486 = int_to_ptr.vmem [resolvable:$true] %s1485
      %1488 = dma.vmem_to_hbm [thread:$0]  %s1486, 128, %s19, [#allocation10]
    $region93: #{tpu_custom_call.1} parent=1 // pred_fallthru
      _
    // Predicated region
    $region94: #{tpu_custom_call.1} parent=1 // pred_check
      _
    $region95: #{tpu_custom_call.1} parent=1 // pred_check_branch
      %1490 = sbr.rel (0) target = $region97
    $region96: #{tpu_custom_call.1} parent=1 // pred_region
      %1491 = dma.done [#allocation10], 128
    $region97: #{tpu_custom_call.1} parent=1 // pred_fallthru
      _
    %1492 = vsyncpa [#allocation9], 1
    %1493 = vsyncpa [#allocation12], 1
    %1494 = vsyncpa [#allocation15], 1
    %1495 = vsyncpa [#allocation18], 1
    %1496 = vsyncpa [#allocation10], 1
  %1497 = vsyncmov [#allocation6]
  %s1498 = vpop.sfrf %1497
  %p1499 = scmp.eq.s32.totalorder %s1498, 0
  %p1500 = pneg %p1499
  %1502 = shalt.err (%p1500)
  %s1503 = scalar_lea.sflag [#allocation6], 1
  %1504 = vsyncmov %s1503
  %s1505 = vpop.sfrf %1504
  %p1506 = scmp.eq.s32.totalorder %s1505, 0
  %p1507 = pneg %p1506
  %1509 = shalt.err (%p1507)
  %s1510 = scalar_lea.sflag [#allocation6], 2
  %1511 = vsyncmov %s1510
  %s1512 = vpop.sfrf %1511
  %p1513 = scmp.eq.s32.totalorder %s1512, 0
  %p1514 = pneg %p1513
  %1516 = shalt.err (%p1514)
  %s1517 = scalar_lea.sflag [#allocation6], 3
  %1518 = vsyncmov %s1517
  %s1519 = vpop.sfrf %1518
  %p1520 = scmp.eq.s32.totalorder %s1519, 0
  %p1521 = pneg %p1520
  %1523 = shalt.err (%p1521)

</llo_original>
